<compile_context>
chip_gen: v5e
topology: v5e:2x2
jax: 0.10.0
libtpu: 0.0.40
codegen_flags: <defaults>
</compile_context>

<pallas_src>
import functools

import jax
import jax.numpy as jnp
from jax import lax
from jax.experimental import pallas as pl
from jax.experimental.pallas import tpu as pltpu

EPS = 1e-5          # nn.BatchNorm2d default eps
NEG_SLOPE = 0.01    # nn.LeakyReLU default negative_slope


def _round_up(a, b):
    return -(-a // b) * b


def _conv_stats_kernel(x_ref, halo_ref, w_ref, b_ref, mask_ref,
                       y_ref, ssum_ref, ssq_ref,
                       ext_ref, xt_ref, *, taps, cin, tm):
    # x_ref   : (Cin, TM)      flat-lane tile of the dilated/padded input
    # halo_ref: (1, Cin, Dp)   first Dp lanes of the NEXT tile (tap halo)
    # w_ref   : (Cout, KC)     flipped ConvTranspose weights, K folded
    # b_ref   : (Cout, 1)      conv bias
    # mask_ref: (1, TM)        1.0 where the lane is a valid output position
    # y_ref   : (Cout, TM)     conv + bias output (garbage at invalid lanes)
    # ssum/ssq: (1, Cout, 1)   per-tile masked BatchNorm partial statistics
    # ext_ref : (Cin, TM+Dp)   VMEM scratch: tile + halo, contiguous lanes
    # xt_ref  : (KC, TM)       VMEM scratch: in-VMEM K-folded im2col tile
    ext_ref[:, :tm] = x_ref[...]
    ext_ref[:, tm:] = halo_ref[0]
    for k, d in enumerate(taps):                     # static loop over KH*KW taps
        xt_ref[k * cin:(k + 1) * cin, :] = ext_ref[:, d:d + tm]
    acc = jnp.dot(w_ref[...], xt_ref[...], preferred_element_type=jnp.float32)
    acc = acc + b_ref[...]                           # broadcast along lanes
    y_ref[...] = acc
    am = acc * mask_ref[...]                         # mask out invalid lanes
    ssum_ref[...] = jnp.sum(am, axis=1, keepdims=True)[None]
    ssq_ref[...] = jnp.sum(am * acc, axis=1, keepdims=True)[None]


def _bn_lrelu_kernel(y_ref, scale_ref, shift_ref, o_ref, *, ow):
    # y_ref: (Cout, 1, T_ROWS_IN, Wp)   scale/shift: (Cout, 1, 1)
    # o_ref: (1, Cout, T_ROWS_OUT, OW)  -- final (N, Cout, OH, OW) layout
    rows = o_ref.shape[2]
    z = y_ref[:, 0, :rows, :] * scale_ref[...] + shift_ref[...]
    z = jnp.where(z >= 0, z, NEG_SLOPE * z)
    o_ref[0] = z[:, :, :ow]


@functools.partial(jax.jit,
                   static_argnames=("kernel_size", "stride", "padding", "tile_m"))
def decoder_forward(x, w_pt, bias, gamma, beta,
                    kernel_size, stride, padding, tile_m=8192):
    """x: (N, Cin, H, W) f32.  w_pt: (Cin, Cout, KH, KW) (PyTorch ConvTranspose2d)."""
    N, Cin, H, W = x.shape
    KH, KW = kernel_size
    sh, sw = stride
    ph, pw = padding
    Cout = w_pt.shape[1]
    KC = KH * KW * Cin

    OH = (H - 1) * sh - 2 * ph + KH
    OW = (W - 1) * sw - 2 * pw + KW
    DH, DW = (H - 1) * sh + 1, (W - 1) * sw + 1
    Hp, Wp = OH + KH - 1, OW + KW - 1      # dilated + padded image size
    L = Hp * Wp                            # per-image flat length
    M2 = N * L                             # flat lane extent (valid + garbage cols)
    Mv = N * OH * OW                       # number of valid output positions

    # tap lane offsets in the flat (row stride Wp) image; order matches w_t rows
    taps = tuple(kh * Wp + kw for kh in range(KH) for kw in range(KW))
    d_max = taps[-1]
    Dp = _round_up(max(d_max, 1), 128)

    # ---- tile size: lane-dense, VMEM-budget aware, >= 2 tiles for megacore ----
    desired = _round_up(max(int(tile_m), 128), 128)
    per_lane = 4 * (3 * Cin + KC + 2 * Cout + 2)        # dbuf x + ext + xt + dbuf y + mask
    budget = 24 * 1024 * 1024
    tm_budget = max(128, (budget // per_lane) // 128 * 128)
    tm_two = _round_up(-(-M2 // 2), 128)                # keep >= 2 grid steps (v7x)
    tm = max(min(desired, tm_budget, tm_two), 128, Dp)
    num_tiles = -(-M2 // tm)
    LT = num_tiles * tm

    # ---- zero-dilated + padded input, flattened per image, images concatenated ----
    # TODO(synk): this dilation/pad scatter is still one XLA pass over ~sh*sw x the
    # input; a phase (sub-convolution) decomposition would remove the dilation zeros.
    xz = jnp.zeros((Cin, N, Hp, Wp), jnp.float32)
    xz = xz.at[:, :, KH - 1 - ph:KH - 1 - ph + DH:sh,
               KW - 1 - pw:KW - 1 - pw + DW:sw].set(
        jnp.transpose(x, (1, 0, 2, 3)).astype(jnp.float32))
    xpf = jnp.pad(xz.reshape(Cin, M2), ((0, 0), (0, LT + tm - M2)))
    # halo[i] = first Dp lanes of tile i+1 (reads only ~Dp/tm of xpf)
    halo = xpf[:, tm:tm + LT].reshape(Cin, num_tiles, tm)[:, :, :Dp]
    halo = jnp.transpose(halo, (1, 0, 2))

    # validity mask over flat lanes (excludes garbage cols/rows and the tile tail)
    m2 = jnp.arange(LT, dtype=jnp.int32)
    r = m2 % L
    valid = (m2 < M2) & (r // Wp < OH) & (r % Wp < OW)
    mask = valid.astype(jnp.float32).reshape(1, LT)

    # flipped ConvTranspose weights, K folded into the contraction
    wf = w_pt[:, :, ::-1, ::-1]                               # (Cin, Cout, KH, KW)
    w_t = jnp.transpose(wf, (1, 2, 3, 0)).reshape(Cout, KC).astype(jnp.float32)
    b_col = bias.reshape(Cout, 1).astype(jnp.float32)

    cparams = pltpu.CompilerParams(dimension_semantics=("parallel",),
                                   vmem_limit_bytes=32 * 1024 * 1024)
    flops = 2 * Cout * KC * LT
    bytes_accessed = 4 * (Cin * LT + num_tiles * Cin * Dp + Cout * KC + Cout
                          + LT + Cout * M2 + 2 * num_tiles * Cout)

    # --- pass 1: in-VMEM tap gather + single folded matmul + bias + masked stats ---
    conv_kern = functools.partial(_conv_stats_kernel, taps=taps, cin=Cin, tm=tm)
    y_conv, psum, psq = pl.pallas_call(
        conv_kern,
        grid=(num_tiles,),
        in_specs=[
            pl.BlockSpec((Cin, tm), lambda i: (0, i)),
            pl.BlockSpec((1, Cin, Dp), lambda i: (i, 0, 0)),
            pl.BlockSpec((Cout, KC), lambda i: (0, 0)),
            pl.BlockSpec((Cout, 1), lambda i: (0, 0)),
            pl.BlockSpec((1, tm), lambda i: (0, i)),
        ],
        out_specs=(
            pl.BlockSpec((Cout, tm), lambda i: (0, i)),
            pl.BlockSpec((1, Cout, 1), lambda i: (i, 0, 0)),
            pl.BlockSpec((1, Cout, 1), lambda i: (i, 0, 0)),
        ),
        out_shape=(
            jax.ShapeDtypeStruct((Cout, M2), jnp.float32),
            jax.ShapeDtypeStruct((num_tiles, Cout, 1), jnp.float32),
            jax.ShapeDtypeStruct((num_tiles, Cout, 1), jnp.float32),
        ),
        scratch_shapes=[pltpu.VMEM((Cin, tm + Dp), jnp.float32),
                        pltpu.VMEM((KC, tm), jnp.float32)],
        compiler_params=cparams,
        cost_estimate=pl.CostEstimate(flops=flops, transcendentals=0,
                                      bytes_accessed=bytes_accessed),
    )(xpf, halo, w_t, b_col, mask)

    # --- tiny JAX epilogue: cross-tile reduction of masked BN stats ---
    tsum = jnp.sum(psum[:, :, 0], axis=0)
    tsq = jnp.sum(psq[:, :, 0], axis=0)
    mean = tsum / Mv
    var = jnp.maximum(tsq / Mv - mean * mean, 0.0)   # guard E[x^2]-mean^2 cancellation
    scale = gamma.astype(jnp.float32) * lax.rsqrt(var + EPS)
    shift = beta.astype(jnp.float32) - mean * scale

    # --- pass 2: BN apply + LeakyReLU, written directly as (N, Cout, OH, OW) ---
    y4 = y_conv.reshape(Cout, N, Hp, Wp)              # free: M2 == N*Hp*Wp
    full_bytes = 4 * 2 * Cout * (Hp * Wp + OH * OW)   # double-buffered in+out per step
    if full_bytes <= 8 * 1024 * 1024:
        t_in, t_out, nt2 = Hp, OH, 1                  # full rows: no edge blocks
    else:
        t2 = max(8, (8 * 1024 * 1024 // (4 * 2 * Cout * (Wp + OW))) // 8 * 8)
        t_in = t_out = min(t2, _round_up(OH, 8))
        nt2 = -(-OH // t_out)

    out = pl.pallas_call(
        functools.partial(_bn_lrelu_kernel, ow=OW),
        grid=(N, nt2),
        in_specs=[
            pl.BlockSpec((Cout, 1, t_in, Wp), lambda n, t: (0, n, t, 0)),
            pl.BlockSpec((Cout, 1, 1), lambda n, t: (0, 0, 0)),
            pl.BlockSpec((Cout, 1, 1), lambda n, t: (0, 0, 0)),
        ],
        out_specs=pl.BlockSpec((1, Cout, t_out, OW), lambda n, t: (n, 0, t, 0)),
        out_shape=jax.ShapeDtypeStruct((N, Cout, OH, OW), jnp.float32),
        compiler_params=pltpu.CompilerParams(
            dimension_semantics=("parallel", "parallel"),
            vmem_limit_bytes=32 * 1024 * 1024),
    )(y4, scale.reshape(Cout, 1, 1), shift.reshape(Cout, 1, 1))
    return out


def decoder_reference(x, w_pt, bias, gamma, beta, kernel_size, stride, padding):
    """Pure-JAX reference matching ConvTranspose2d + BatchNorm2d(train) + LeakyReLU."""
    KH, KW = kernel_size
    sh, sw = stride
    ph, pw = padding
    w_conv = jnp.transpose(w_pt[:, :, ::-1, ::-1], (1, 0, 2, 3))  # (Cout, Cin, KH, KW)
    y = lax.conv_general_dilated(
        x, w_conv, window_strides=(1, 1),
        padding=[(KH - 1 - ph, KH - 1 - ph), (KW - 1 - pw, KW - 1 - pw)],
        lhs_dilation=(sh, sw),
        dimension_numbers=("NCHW", "OIHW", "NCHW"),
        precision=lax.Precision.HIGHEST)
    y = y + bias[None, :, None, None]
    mean = jnp.mean(y, axis=(0, 2, 3), keepdims=True)
    var = jnp.mean((y - mean) ** 2, axis=(0, 2, 3), keepdims=True)
    y = (y - mean) * (gamma[None, :, None, None] * lax.rsqrt(var + EPS)) \
        + beta[None, :, None, None]
    return jnp.where(y >= 0, y, NEG_SLOPE * y)


if __name__ == "__main__":
    key = jax.random.PRNGKey(0)
    N, Cin, H, W = 2, 8, 16, 8
    Cout = 16
    kernel_size, stride, padding = (3, 2), (2, 1), (1, 0)

    k1, k2, k3, k4, k5 = jax.random.split(key, 5)
    x = jax.random.normal(k1, (N, Cin, H, W), jnp.float32)
    w_pt = 0.1 * jax.random.normal(k2, (Cin, Cout, kernel_size[0], kernel_size[1]),
                                   jnp.float32)
    bias = 0.1 * jax.random.normal(k3, (Cout,), jnp.float32)
    gamma = 1.0 + 0.1 * jax.random.normal(k4, (Cout,), jnp.float32)
    beta = 0.1 * jax.random.normal(k5, (Cout,), jnp.float32)

    out = jax.block_until_ready(
        decoder_forward(x, w_pt, bias, gamma, beta,
                        kernel_size=kernel_size, stride=stride, padding=padding))
    ref = decoder_reference(x, w_pt, bias, gamma, beta, kernel_size, stride, padding)

    assert out.shape == ref.shape, (out.shape, ref.shape)
    max_err = float(jnp.max(jnp.abs(out - ref)))
    assert jnp.allclose(out, ref, atol=1e-4, rtol=1e-4), max_err
    print("KERNEL_OK")
</pallas_src>

<mosaic_0001>
module attributes {stable_mosaic.version = 11 : i64} {
  func.func @_conv_stats_kernel(%arg0: i32, %arg1: memref<8x384xf32, #tpu.memory_space<vmem>>, %arg2: memref<1x8x128xf32, #tpu.memory_space<vmem>>, %arg3: memref<16x48xf32, #tpu.memory_space<vmem>>, %arg4: memref<16x1xf32, #tpu.memory_space<vmem>>, %arg5: memref<1x384xf32, #tpu.memory_space<vmem>>, %arg6: memref<16x384xf32, #tpu.memory_space<vmem>>, %arg7: memref<1x16x1xf32, #tpu.memory_space<vmem>>, %arg8: memref<1x16x1xf32, #tpu.memory_space<vmem>>, %arg9: memref<8x512xf32, #tpu.memory_space<vmem>>, %arg10: memref<48x384xf32, #tpu.memory_space<vmem>>) attributes {dimension_semantics = [#tpu.dimension_semantics<parallel>], iteration_bounds = array<i64: 2>, scalar_prefetch = 0 : i64, scratch_operands = 2 : i64, tpu.core_type = #tpu.core_type<tc>, window_params = [{transform_indices = @transform_0, window_bounds = array<i64: 8, 384>}, {transform_indices = @transform_1, window_bounds = array<i64: 1, 8, 128>}, {pipeline_mode = #tpu.pipeline_mode<synchronous>, transform_indices = @transform_2, window_bounds = array<i64: 16, 48>}, {pipeline_mode = #tpu.pipeline_mode<synchronous>, transform_indices = @transform_3, window_bounds = array<i64: 16, 1>}, {transform_indices = @transform_4, window_bounds = array<i64: 1, 384>}, {transform_indices = @transform_5, window_bounds = array<i64: 16, 384>}, {transform_indices = @transform_6, window_bounds = array<i64: 1, 16, 1>}, {transform_indices = @transform_7, window_bounds = array<i64: 1, 16, 1>}]} {
    %c0 = arith.constant 0 : index
    %c0_0 = arith.constant 0 : index
    %0 = vector.load %arg1[%c0, %c0_0] : memref<8x384xf32, #tpu.memory_space<vmem>>, vector<8x384xf32>
    %c0_1 = arith.constant 0 : index
    %c0_2 = arith.constant 0 : index
    %1 = vector.load %arg9[%c0_1, %c0_2] : memref<8x512xf32, #tpu.memory_space<vmem>>, vector<8x384xf32>
    tpu.vector_store %arg9[%c0_1, %c0_2], %0 {strides = array<i32>} : memref<8x512xf32, #tpu.memory_space<vmem>>, vector<8x384xf32>,
    %c0_3 = arith.constant 0 : index
    %c0_4 = arith.constant 0 : index
    %c0_5 = arith.constant 0 : index
    %2 = vector.load %arg2[%c0_3, %c0_4, %c0_5] : memref<1x8x128xf32, #tpu.memory_space<vmem>>, vector<1x8x128xf32>
    %3 = vector.shape_cast %2 : vector<1x8x128xf32> to vector<8x128xf32>
    %c0_6 = arith.constant 0 : index
    %c384 = arith.constant 384 : index
    %4 = vector.load %arg9[%c0_6, %c384] : memref<8x512xf32, #tpu.memory_space<vmem>>, vector<8x128xf32>
    tpu.vector_store %arg9[%c0_6, %c384], %3 {strides = array<i32>} : memref<8x512xf32, #tpu.memory_space<vmem>>, vector<8x128xf32>,
    %c0_7 = arith.constant 0 : index
    %c0_8 = arith.constant 0 : index
    %5 = vector.load %arg9[%c0_7, %c0_8] : memref<8x512xf32, #tpu.memory_space<vmem>>, vector<8x384xf32>
    %c0_9 = arith.constant 0 : index
    %c0_10 = arith.constant 0 : index
    %6 = vector.load %arg10[%c0_9, %c0_10] : memref<48x384xf32, #tpu.memory_space<vmem>>, vector<8x384xf32>
    tpu.vector_store %arg10[%c0_9, %c0_10], %5 {strides = array<i32>} : memref<48x384xf32, #tpu.memory_space<vmem>>, vector<8x384xf32>,
    %c0_11 = arith.constant 0 : index
    %c1 = arith.constant 1 : index
    %7 = vector.load %arg9[%c0_11, %c1] : memref<8x512xf32, #tpu.memory_space<vmem>>, vector<8x384xf32>
    %c8 = arith.constant 8 : index
    %c0_12 = arith.constant 0 : index
    %8 = vector.load %arg10[%c8, %c0_12] : memref<48x384xf32, #tpu.memory_space<vmem>>, vector<8x384xf32>
    tpu.vector_store %arg10[%c8, %c0_12], %7 {strides = array<i32>} : memref<48x384xf32, #tpu.memory_space<vmem>>, vector<8x384xf32>,
    %c0_13 = arith.constant 0 : index
    %c10 = arith.constant 10 : index
    %9 = vector.load %arg9[%c0_13, %c10] : memref<8x512xf32, #tpu.memory_space<vmem>>, vector<8x384xf32>
    %c16 = arith.constant 16 : index
    %c0_14 = arith.constant 0 : index
    %10 = vector.load %arg10[%c16, %c0_14] : memref<48x384xf32, #tpu.memory_space<vmem>>, vector<8x384xf32>
    tpu.vector_store %arg10[%c16, %c0_14], %9 {strides = array<i32>} : memref<48x384xf32, #tpu.memory_space<vmem>>, vector<8x384xf32>,
    %c0_15 = arith.constant 0 : index
    %c11 = arith.constant 11 : index
    %11 = vector.load %arg9[%c0_15, %c11] : memref<8x512xf32, #tpu.memory_space<vmem>>, vector<8x384xf32>
    %c24 = arith.constant 24 : index
    %c0_16 = arith.constant 0 : index
    %12 = vector.load %arg10[%c24, %c0_16] : memref<48x384xf32, #tpu.memory_space<vmem>>, vector<8x384xf32>
    tpu.vector_store %arg10[%c24, %c0_16], %11 {strides = array<i32>} : memref<48x384xf32, #tpu.memory_space<vmem>>, vector<8x384xf32>,
    %c0_17 = arith.constant 0 : index
    %c20 = arith.constant 20 : index
    %13 = vector.load %arg9[%c0_17, %c20] : memref<8x512xf32, #tpu.memory_space<vmem>>, vector<8x384xf32>
    %c32 = arith.constant 32 : index
    %c0_18 = arith.constant 0 : index
    %14 = vector.load %arg10[%c32, %c0_18] : memref<48x384xf32, #tpu.memory_space<vmem>>, vector<8x384xf32>
    tpu.vector_store %arg10[%c32, %c0_18], %13 {strides = array<i32>} : memref<48x384xf32, #tpu.memory_space<vmem>>, vector<8x384xf32>,
    %c0_19 = arith.constant 0 : index
    %c21 = arith.constant 21 : index
    %15 = vector.load %arg9[%c0_19, %c21] : memref<8x512xf32, #tpu.memory_space<vmem>>, vector<8x384xf32>
    %c40 = arith.constant 40 : index
    %c0_20 = arith.constant 0 : index
    %16 = vector.load %arg10[%c40, %c0_20] : memref<48x384xf32, #tpu.memory_space<vmem>>, vector<8x384xf32>
    tpu.vector_store %arg10[%c40, %c0_20], %15 {strides = array<i32>} : memref<48x384xf32, #tpu.memory_space<vmem>>, vector<8x384xf32>,
    %c0_21 = arith.constant 0 : index
    %c0_22 = arith.constant 0 : index
    %17 = vector.load %arg3[%c0_21, %c0_22] : memref<16x48xf32, #tpu.memory_space<vmem>>, vector<16x48xf32>
    %c0_23 = arith.constant 0 : index
    %c0_24 = arith.constant 0 : index
    %18 = vector.load %arg10[%c0_23, %c0_24] : memref<48x384xf32, #tpu.memory_space<vmem>>, vector<48x384xf32>
    %cst = arith.constant dense<0.000000e+00> : vector<16x384xf32>
    %19 = tpu.matmul %17, %18, %cst {dimension_numbers = #tpu.dot_dimension_numbers<[1], [0], [0], [1], [0, 0, 1, 1], [], []>} : vector<16x48xf32>, vector<48x384xf32>, vector<16x384xf32> -> vector<16x384xf32>
    %c0_25 = arith.constant 0 : index
    %c0_26 = arith.constant 0 : index
    %20 = vector.load %arg4[%c0_25, %c0_26] : memref<16x1xf32, #tpu.memory_space<vmem>>, vector<16x1xf32>
    %21 = vector.broadcast %20 : vector<16x1xf32> to vector<16x384xf32>
    %22 = arith.addf %19, %21 : vector<16x384xf32>
    %c0_27 = arith.constant 0 : index
    %c0_28 = arith.constant 0 : index
    %23 = vector.load %arg6[%c0_27, %c0_28] : memref<16x384xf32, #tpu.memory_space<vmem>>, vector<16x384xf32>
    tpu.vector_store %arg6[%c0_27, %c0_28], %22 {strides = array<i32>} : memref<16x384xf32, #tpu.memory_space<vmem>>, vector<16x384xf32>,
    %c0_29 = arith.constant 0 : index
    %c0_30 = arith.constant 0 : index
    %24 = vector.load %arg5[%c0_29, %c0_30] : memref<1x384xf32, #tpu.memory_space<vmem>>, vector<1x384xf32>
    %25 = vector.broadcast %24 : vector<1x384xf32> to vector<16x384xf32>
    %26 = arith.mulf %22, %25 : vector<16x384xf32>
    %cst_31 = arith.constant dense<0.000000e+00> : vector<16xf32>
    %27 = vector.multi_reduction <add>, %26, %cst_31 [1] : vector<16x384xf32> to vector<16xf32>
    %28 = vector.shape_cast %27 : vector<16xf32> to vector<16x1xf32>
    %29 = vector.shape_cast %28 : vector<16x1xf32> to vector<1x16x1xf32>
    %c0_32 = arith.constant 0 : index
    %c0_33 = arith.constant 0 : index
    %c0_34 = arith.constant 0 : index
    %30 = vector.load %arg7[%c0_32, %c0_33, %c0_34] : memref<1x16x1xf32, #tpu.memory_space<vmem>>, vector<1x16x1xf32>
    tpu.vector_store %arg7[%c0_32, %c0_33, %c0_34], %29 {strides = array<i32>} : memref<1x16x1xf32, #tpu.memory_space<vmem>>, vector<1x16x1xf32>,
    %31 = arith.mulf %26, %22 : vector<16x384xf32>
    %cst_35 = arith.constant dense<0.000000e+00> : vector<16xf32>
    %32 = vector.multi_reduction <add>, %31, %cst_35 [1] : vector<16x384xf32> to vector<16xf32>
    %33 = vector.shape_cast %32 : vector<16xf32> to vector<16x1xf32>
    %34 = vector.shape_cast %33 : vector<16x1xf32> to vector<1x16x1xf32>
    %c0_36 = arith.constant 0 : index
    %c0_37 = arith.constant 0 : index
    %c0_38 = arith.constant 0 : index
    %35 = vector.load %arg8[%c0_36, %c0_37, %c0_38] : memref<1x16x1xf32, #tpu.memory_space<vmem>>, vector<1x16x1xf32>
    tpu.vector_store %arg8[%c0_36, %c0_37, %c0_38], %34 {strides = array<i32>} : memref<1x16x1xf32, #tpu.memory_space<vmem>>, vector<1x16x1xf32>,
    return
  }
  func.func @transform_0(%arg0: i32) -> (i32, i32) {
    %c0_i32 = arith.constant 0 : i32
    %c0_i32_0 = arith.constant 0 : i32
    return %c0_i32, %arg0 : i32, i32
  }
  func.func @transform_1(%arg0: i32) -> (i32, i32, i32) {
    %c0_i32 = arith.constant 0 : i32
    %c0_i32_0 = arith.constant 0 : i32
    %c0_i32_1 = arith.constant 0 : i32
    return %arg0, %c0_i32, %c0_i32_0 : i32, i32, i32
  }
  func.func @transform_2(%arg0: i32) -> (i32, i32) {
    %c0_i32 = arith.constant 0 : i32
    %c0_i32_0 = arith.constant 0 : i32
    %c0_i32_1 = arith.constant 0 : i32
    return %c0_i32, %c0_i32_0 : i32, i32
  }
  func.func @transform_3(%arg0: i32) -> (i32, i32) {
    %c0_i32 = arith.constant 0 : i32
    %c0_i32_0 = arith.constant 0 : i32
    %c0_i32_1 = arith.constant 0 : i32
    return %c0_i32, %c0_i32_0 : i32, i32
  }
  func.func @transform_4(%arg0: i32) -> (i32, i32) {
    %c0_i32 = arith.constant 0 : i32
    %c0_i32_0 = arith.constant 0 : i32
    return %c0_i32, %arg0 : i32, i32
  }
  func.func @transform_5(%arg0: i32) -> (i32, i32) {
    %c0_i32 = arith.constant 0 : i32
    %c0_i32_0 = arith.constant 0 : i32
    return %c0_i32, %arg0 : i32, i32
  }
  func.func @transform_6(%arg0: i32) -> (i32, i32, i32) {
    %c0_i32 = arith.constant 0 : i32
    %c0_i32_0 = arith.constant 0 : i32
    %c0_i32_1 = arith.constant 0 : i32
    return %arg0, %c0_i32, %c0_i32_0 : i32, i32, i32
  }
  func.func @transform_7(%arg0: i32) -> (i32, i32, i32) {
    %c0_i32 = arith.constant 0 : i32
    %c0_i32_0 = arith.constant 0 : i32
    %c0_i32_1 = arith.constant 0 : i32
    return %arg0, %c0_i32, %c0_i32_0 : i32, i32, i32
  }
}

module attributes {stable_mosaic.version = 11 : i64} {
  func.func @_bn_lrelu_kernel(%arg0: i32, %arg1: i32, %arg2: memref<16x1x33x10xf32, #tpu.memory_space<vmem>>, %arg3: memref<16x1x1xf32, #tpu.memory_space<vmem>>, %arg4: memref<16x1x1xf32, #tpu.memory_space<vmem>>, %arg5: memref<1x16x31x9xf32, #tpu.memory_space<vmem>>) attributes {dimension_semantics = [#tpu.dimension_semantics<parallel>, #tpu.dimension_semantics<parallel>], iteration_bounds = array<i64: 2, 1>, scalar_prefetch = 0 : i64, scratch_operands = 0 : i64, tpu.core_type = #tpu.core_type<tc>, window_params = [{transform_indices = @transform_0, window_bounds = array<i64: 16, 1, 33, 10>}, {pipeline_mode = #tpu.pipeline_mode<synchronous>, transform_indices = @transform_1, window_bounds = array<i64: 16, 1, 1>}, {pipeline_mode = #tpu.pipeline_mode<synchronous>, transform_indices = @transform_2, window_bounds = array<i64: 16, 1, 1>}, {transform_indices = @transform_3, window_bounds = array<i64: 1, 16, 31, 9>}]} {
    %c0 = arith.constant 0 : index
    %c0_0 = arith.constant 0 : index
    %c0_1 = arith.constant 0 : index
    %c0_2 = arith.constant 0 : index
    %0 = vector.load %arg2[%c0, %c0_0, %c0_1, %c0_2] : memref<16x1x33x10xf32, #tpu.memory_space<vmem>>, vector<16x1x31x10xf32>
    %1 = vector.shape_cast %0 : vector<16x1x31x10xf32> to vector<16x31x10xf32>
    %c0_3 = arith.constant 0 : index
    %c0_4 = arith.constant 0 : index
    %c0_5 = arith.constant 0 : index
    %2 = vector.load %arg3[%c0_3, %c0_4, %c0_5] : memref<16x1x1xf32, #tpu.memory_space<vmem>>, vector<16x1x1xf32>
    %3 = vector.broadcast %2 : vector<16x1x1xf32> to vector<16x31x10xf32>
    %4 = arith.mulf %1, %3 : vector<16x31x10xf32>
    %c0_6 = arith.constant 0 : index
    %c0_7 = arith.constant 0 : index
    %c0_8 = arith.constant 0 : index
    %5 = vector.load %arg4[%c0_6, %c0_7, %c0_8] : memref<16x1x1xf32, #tpu.memory_space<vmem>>, vector<16x1x1xf32>
    %6 = vector.broadcast %5 : vector<16x1x1xf32> to vector<16x31x10xf32>
    %7 = arith.addf %4, %6 : vector<16x31x10xf32>
    %cst = arith.constant 0.000000e+00 : f32
    %8 = vector.broadcast %cst : f32 to vector<16x31x10xf32>
    %9 = arith.cmpf oge, %7, %8 : vector<16x31x10xf32>
    %cst_9 = arith.constant 0.00999999977 : f32
    %10 = vector.broadcast %cst_9 : f32 to vector<16x31x10xf32>
    %11 = arith.mulf %10, %7 : vector<16x31x10xf32>
    %12 = arith.select %9, %7, %11 : vector<16x31x10xi1>, vector<16x31x10xf32>
    %13 = vector.extract_strided_slice %12 {offsets = [0, 0, 0], sizes = [16, 31, 9], strides = [1, 1, 1]} : vector<16x31x10xf32> to vector<16x31x9xf32>
    %c0_10 = arith.constant 0 : index
    %c0_11 = arith.constant 0 : index
    %c0_12 = arith.constant 0 : index
    %c0_13 = arith.constant 0 : index
    %14 = vector.load %arg5[%c0_10, %c0_11, %c0_12, %c0_13] : memref<1x16x31x9xf32, #tpu.memory_space<vmem>>, vector<1x16x31x9xf32>
    %15 = vector.shape_cast %14 : vector<1x16x31x9xf32> to vector<16x31x9xf32>
    %16 = vector.shape_cast %13 : vector<16x31x9xf32> to vector<1x16x31x9xf32>
    tpu.vector_store %arg5[%c0_10, %c0_11, %c0_12, %c0_13], %16 {strides = array<i32>} : memref<1x16x31x9xf32, #tpu.memory_space<vmem>>, vector<1x16x31x9xf32>,
    return
  }
  func.func @transform_0(%arg0: i32, %arg1: i32) -> (i32, i32, i32, i32) {
    %c0_i32 = arith.constant 0 : i32
    %c0_i32_0 = arith.constant 0 : i32
    %c0_i32_1 = arith.constant 0 : i32
    return %c0_i32, %arg0, %arg1, %c0_i32_0 : i32, i32, i32, i32
  }
  func.func @transform_1(%arg0: i32, %arg1: i32) -> (i32, i32, i32) {
    %c0_i32 = arith.constant 0 : i32
    %c0_i32_0 = arith.constant 0 : i32
    %c0_i32_1 = arith.constant 0 : i32
    %c0_i32_2 = arith.constant 0 : i32
    return %c0_i32, %c0_i32_0, %c0_i32_1 : i32, i32, i32
  }
  func.func @transform_2(%arg0: i32, %arg1: i32) -> (i32, i32, i32) {
    %c0_i32 = arith.constant 0 : i32
    %c0_i32_0 = arith.constant 0 : i32
    %c0_i32_1 = arith.constant 0 : i32
    %c0_i32_2 = arith.constant 0 : i32
    return %c0_i32, %c0_i32_0, %c0_i32_1 : i32, i32, i32
  }
  func.func @transform_3(%arg0: i32, %arg1: i32) -> (i32, i32, i32, i32) {
    %c0_i32 = arith.constant 0 : i32
    %c0_i32_0 = arith.constant 0 : i32
    %c0_i32_1 = arith.constant 0 : i32
    return %arg0, %c0_i32, %arg1, %c0_i32_0 : i32, i32, i32, i32
  }
}

</mosaic_0001>

<llo_original>
// kernel: decoder_forward.3
$region0: #{decoder_forward.3}
  #allocation0 [shape = 'u32[]', space=smem, size = 0x4, offset = 0x4, fixed_abs, tag = 'smem constant byte address 0x4 - core index']
  #allocation1 [shape = 'u32[72,128]{1,0:T(1,128)}', space=vmem, size = 0x9000, scoped, tag = 'internal scratch']
  %s0 = inlined_call_operand.vmem [shape: f32[16,2,33,10], index: 0, kind: input, shape index: {}]
  %s1 = inlined_call_operand.vmem [shape: f32[16,1,1], index: 1, kind: input, shape index: {}]
  %s2 = inlined_call_operand.vmem [shape: f32[16,1,1], index: 2, kind: input, shape index: {}]
  %s3 = inlined_call_operand.vmem [shape: f32[2,16,31,9], index: 3, kind: output, shape index: {}]
  %s4 = sld [smem:[#allocation0]]
  $region83: #{decoder_forward.3} parent=0
    _
  %s6 = ssub.s32 1, %s4
  %s7 = scalar_select 0, %s6, %s4
  $region1: #{decoder_forward.3} parent=0
    #allocation2 [shape = 'u8[655360]{0}', space=vmem, size = 0xa0000, scoped, tag = 'input window, operand 0']
    loop: start=0, step=1, limit=4
    $region2: #{decoder_forward.3} parent=1 // loop_pre_header
      _
    $region3: #{decoder_forward.3} parent=1 // loop_header
      %s9 = sphi 0, %s13
      %p10 = scmp.ge.s32.totalorder %s9, 4
      %s16 = sphi 0, %s28
      %s17 = sphi 0, %s24
      %s18 = sphi 0, %s16
      %s19 = sphi 0, %s17
      %s20 = sphi 0, %s18
      %s21 = sphi 0, %s19
      %s33 = sphi 0, %s35
      %s36 = sphi 0, %s33
      %s37 = sphi 0, %s36
      %s53 = sphi 0, %s37
      %s57 = sphi 0, %s57
      %s59 = sphi 0, %s57
      %s60 = sphi 0, %s59
      %s74 = sphi 0, %s60
      %s78 = sphi 0, %s78
      %s80 = sphi 0, %s78
      %s81 = sphi 0, %s80
      %s95 = sphi 0, %s81
      %s103 = sphi 0, %s105
      %s106 = sphi 0, %s103
      %s107 = sphi 0, %s106
      %s123 = sphi 0, %s107
    $region4: #{decoder_forward.3} parent=1 // loop_header_branch
      %12 = sbr.rel (%p10) target = $region8
    $region5: #{decoder_forward.3} parent=1 // loop_body
      %s14 = ssub.s32 %s9, 1
      %s15 = ssub.s32 %s9, 2
      %s22 = sadd.s32 1, %s17
      %p23 = scmp.ge.s32.totalorder %s22, 1
      %s24 = scalar_select %p23, 0, %s22
      %s25 = sadd.s32 1, %s16
      %s26 = scalar_select %p23, %s25, %s16
      %p27 = scmp.ge.s32.totalorder %s26, 2
      %s28 = scalar_select %p27, 0, %s26
      %s29 = ssub.s32 %s16, %s28
      %s30 = ssub.s32 %s17, %s24
      %s31 = sor.u32 %s29, %s30
      %p32 = scmp.eq.s32.totalorder %s31, 0
      %s34 = sadd.s32 %s33, 1
      %s35 = scalar_select %p32, %s33, %s34
      %p38 = pneg %p32
      %p39 = scmp.eq.s32.totalorder %s9, 1
      %p40 = por %p38, %p39
      %p41 = scmp.ne.s32.totalorder %s33, %s36
      %p42 = scmp.eq.s32.totalorder %s9, 0
      %p43 = por %p41, %p42
      %p44 = scmp.ne.s32.totalorder %s33, %s36
      %p45 = scmp.eq.s32.totalorder %s14, 1
      %p46 = por %p44, %p45
      %p47 = scmp.ne.s32.totalorder %s36, %s37
      %p48 = scmp.eq.s32.totalorder %s14, 0
      %p49 = por %p47, %p48
      %p50 = scmp.ne.s32.totalorder %s36, %s37
      %p51 = scmp.eq.s32.totalorder %s15, 1
      %p52 = por %p50, %p51
      %p54 = scmp.ne.s32.totalorder %s37, %s53
      %p55 = scmp.eq.s32.totalorder %s15, 0
      %p56 = por %p54, %p55
      %s58 = sadd.s32 %s57, 1
      %p61 = scmp.eq.s32.totalorder %s9, 1
      %p62 = scmp.ne.s32.totalorder %s57, %s59
      %p63 = scmp.eq.s32.totalorder %s9, 0
      %p64 = por %p62, %p63
      %p65 = scmp.ne.s32.totalorder %s57, %s59
      %p66 = scmp.eq.s32.totalorder %s14, 1
      %p67 = por %p65, %p66
      %p68 = scmp.ne.s32.totalorder %s59, %s60
      %p69 = scmp.eq.s32.totalorder %s14, 0
      %p70 = por %p68, %p69
      %p71 = scmp.ne.s32.totalorder %s59, %s60
      %p72 = scmp.eq.s32.totalorder %s15, 1
      %p73 = por %p71, %p72
      %p75 = scmp.ne.s32.totalorder %s60, %s74
      %p76 = scmp.eq.s32.totalorder %s15, 0
      %p77 = por %p75, %p76
      %s79 = sadd.s32 %s78, 1
      %p82 = scmp.eq.s32.totalorder %s9, 1
      %p83 = scmp.ne.s32.totalorder %s78, %s80
      %p84 = scmp.eq.s32.totalorder %s9, 0
      %p85 = por %p83, %p84
      %p86 = scmp.ne.s32.totalorder %s78, %s80
      %p87 = scmp.eq.s32.totalorder %s14, 1
      %p88 = por %p86, %p87
      %p89 = scmp.ne.s32.totalorder %s80, %s81
      %p90 = scmp.eq.s32.totalorder %s14, 0
      %p91 = por %p89, %p90
      %p92 = scmp.ne.s32.totalorder %s80, %s81
      %p93 = scmp.eq.s32.totalorder %s15, 1
      %p94 = por %p92, %p93
      %p96 = scmp.ne.s32.totalorder %s81, %s95
      %p97 = scmp.eq.s32.totalorder %s15, 0
      %p98 = por %p96, %p97
      %s99 = ssub.s32 %s16, %s28
      %s100 = ssub.s32 %s17, %s24
      %s101 = sor.u32 %s99, %s100
      %p102 = scmp.eq.s32.totalorder %s101, 0
      %s104 = sadd.s32 %s103, 1
      %s105 = scalar_select %p102, %s103, %s104
      %p108 = pneg %p102
      %p109 = scmp.eq.s32.totalorder %s9, 1
      %p110 = por %p108, %p109
      %p111 = scmp.ne.s32.totalorder %s103, %s106
      %p112 = scmp.eq.s32.totalorder %s9, 0
      %p113 = por %p111, %p112
      %p114 = scmp.ne.s32.totalorder %s103, %s106
      %p115 = scmp.eq.s32.totalorder %s14, 1
      %p116 = por %p114, %p115
      %p117 = scmp.ne.s32.totalorder %s106, %s107
      %p118 = scmp.eq.s32.totalorder %s14, 0
      %p119 = por %p117, %p118
      %p120 = scmp.ne.s32.totalorder %s106, %s107
      %p121 = scmp.eq.s32.totalorder %s15, 1
      %p122 = por %p120, %p121
      %p124 = scmp.ne.s32.totalorder %s107, %s123
      %p125 = scmp.eq.s32.totalorder %s15, 0
      %p126 = por %p124, %p125
      %p127 = scmp.le.s32.totalorder 1, %s9
      %p128 = scmp.lt.s32.totalorder %s9, 3
      %p129 = pnand %p127, %p128
      %p130 = pneg %p129
      // Predicated region
      $region9: #{decoder_forward.3} parent=5 // pred_check
        _
      $region10: #{decoder_forward.3} parent=5 // pred_check_branch
        %132 = sbr.rel (%p129) target = $region12
      $region11: #{decoder_forward.3} parent=5 // pred_region
        %s133 = ssub.s32 %s9, 1
        // Predicated region
        $region13: #{decoder_forward.3} parent=11 // pred_check
          %p134 = pneg %p70
        $region14: #{decoder_forward.3} parent=11 // pred_check_branch
          %136 = sbr.rel (%p134) target = $region16
        $region15: #{decoder_forward.3} parent=11 // pred_region
          _
        $region16: #{decoder_forward.3} parent=11 // pred_fallthru
          _
        // Predicated region
        $region17: #{decoder_forward.3} parent=11 // pred_check
          %p137 = pneg %p91
        $region18: #{decoder_forward.3} parent=11 // pred_check_branch
          %139 = sbr.rel (%p137) target = $region20
        $region19: #{decoder_forward.3} parent=11 // pred_region
          _
        $region20: #{decoder_forward.3} parent=11 // pred_fallthru
          _
      $region12: #{decoder_forward.3} parent=5 // pred_fallthru
        _
      %p140 = scmp.lt.s32.totalorder %s9, 2
      // Predicated region
      $region21: #{decoder_forward.3} parent=5 // pred_check
        %p141 = pneg %p140
      $region22: #{decoder_forward.3} parent=5 // pred_check_branch
        %143 = sbr.rel (%p141) target = $region24
      $region23: #{decoder_forward.3} parent=5 // pred_region
        // Predicated region
        $region25: #{decoder_forward.3} parent=23 // pred_check
          %p144 = pneg %p43
        $region26: #{decoder_forward.3} parent=23 // pred_check_branch
          %146 = sbr.rel (%p144) target = $region28
        $region27: #{decoder_forward.3} parent=23 // pred_region
          %s147 = sand.u32 %s33, 1
          %s148 = sand.u32 %s33, 1
          %s149 = smul.addr %s148, 640
          %s150 = scalar_lea.vmem [#allocation2], %s149
          %s151 = smul.u32 5, %s17
          %s152 = smul.addr %s16, 5
          %s153 = sadd.s32 %s151, %s152
          %s154 = smul.addr %s153, 8
          %s155 = scalar_lea.vmem %s0, %s154
          // Predicated region
          $region29: #{decoder_forward.3} parent=27 // pred_check
            _
          $region30: #{decoder_forward.3} parent=27 // pred_check_branch
            %157 = sbr.rel (0) target = $region32
          $region31: #{decoder_forward.3} parent=27 // pred_region
            // Predicated region
            $region33: #{decoder_forward.3} parent=31 // pred_check
              _
            $region34: #{decoder_forward.3} parent=31 // pred_check_branch
              %159 = sbr.rel (0) target = $region36
            $region35: #{decoder_forward.3} parent=31 // pred_region
              // Predicated region
              $region48: #{decoder_forward.3} parent=35 // pred_check
                _
              $region49: #{decoder_forward.3} parent=35 // pred_check_branch
                %333 = sbr.rel (0) target = $region51
              $region50: #{decoder_forward.3} parent=35 // pred_region
                loop: start=0, step=1, limit=1
                $region52: #{decoder_forward.3} parent=50 // loop_pre_header
                  _
                $region53: #{decoder_forward.3} parent=50 // loop_header
                  %s335 = sphi 0, %s339
                  %p336 = scmp.ge.s32.totalorder %s335, 1
                  %s340 = sphi %s155, %s155
                  %s341 = sphi %s150, %s150
                $region54: #{decoder_forward.3} parent=50 // loop_header_branch
                  %338 = sbr.rel (%p336) target = $region58
                $region55: #{decoder_forward.3} parent=50 // loop_body
                  %v342 = vld [vmem:[%s340] sm:$0xff]
                  %343 = vst [vmem:[%s341] sm:$0xff] %v342
                  %v344 = vld [vmem:[%s340 + $0x8] sm:$0xff]
                  %345 = vst [vmem:[%s341 + $0x8] sm:$0xff] %v344
                  %v346 = vld [vmem:[%s340 + $0x10] sm:$0xff]
                  %347 = vst [vmem:[%s341 + $0x10] sm:$0xff] %v346
                  %v348 = vld [vmem:[%s340 + $0x18] sm:$0xff]
                  %349 = vst [vmem:[%s341 + $0x18] sm:$0xff] %v348
                  %v350 = vld [vmem:[%s340 + $0x20] sm:$0xff]
                  %351 = vst [vmem:[%s341 + $0x20] sm:$0xff] %v350
                  %v352 = vld [vmem:[%s340 + $0x50] sm:$0xff]
                  %353 = vst [vmem:[%s341 + $0x28] sm:$0xff] %v352
                  %v354 = vld [vmem:[%s340 + $0x58] sm:$0xff]
                  %355 = vst [vmem:[%s341 + $0x30] sm:$0xff] %v354
                  %v356 = vld [vmem:[%s340 + $0x60] sm:$0xff]
                  %357 = vst [vmem:[%s341 + $0x38] sm:$0xff] %v356
                  %v358 = vld [vmem:[%s340 + $0x68] sm:$0xff]
                  %359 = vst [vmem:[%s341 + $0x40] sm:$0xff] %v358
                  %v360 = vld [vmem:[%s340 + $0x70] sm:$0xff]
                  %361 = vst [vmem:[%s341 + $0x48] sm:$0xff] %v360
                  %v362 = vld [vmem:[%s340 + $0xa0] sm:$0xff]
                  %363 = vst [vmem:[%s341 + $0x50] sm:$0xff] %v362
                  %v364 = vld [vmem:[%s340 + $0xa8] sm:$0xff]
                  %365 = vst [vmem:[%s341 + $0x58] sm:$0xff] %v364
                  %v366 = vld [vmem:[%s340 + $0xb0] sm:$0xff]
                  %367 = vst [vmem:[%s341 + $0x60] sm:$0xff] %v366
                  %v368 = vld [vmem:[%s340 + $0xb8] sm:$0xff]
                  %369 = vst [vmem:[%s341 + $0x68] sm:$0xff] %v368
                  %v370 = vld [vmem:[%s340 + $0xc0] sm:$0xff]
                  %371 = vst [vmem:[%s341 + $0x70] sm:$0xff] %v370
                  %v372 = vld [vmem:[%s340 + $0xf0] sm:$0xff]
                  %373 = vst [vmem:[%s341 + $0x78] sm:$0xff] %v372
                  %v374 = vld [vmem:[%s340 + $0xf8] sm:$0xff]
                  %375 = vst [vmem:[%s341 + $0x80] sm:$0xff] %v374
                  %v376 = vld [vmem:[%s340 + $0x100] sm:$0xff]
                  %377 = vst [vmem:[%s341 + $0x88] sm:$0xff] %v376
                  %v378 = vld [vmem:[%s340 + $0x108] sm:$0xff]
                  %379 = vst [vmem:[%s341 + $0x90] sm:$0xff] %v378
                  %v380 = vld [vmem:[%s340 + $0x110] sm:$0xff]
                  %381 = vst [vmem:[%s341 + $0x98] sm:$0xff] %v380
                  %v382 = vld [vmem:[%s340 + $0x140] sm:$0xff]
                  %383 = vst [vmem:[%s341 + $0xa0] sm:$0xff] %v382
                  %v384 = vld [vmem:[%s340 + $0x148] sm:$0xff]
                  %385 = vst [vmem:[%s341 + $0xa8] sm:$0xff] %v384
                  %v386 = vld [vmem:[%s340 + $0x150] sm:$0xff]
                  %387 = vst [vmem:[%s341 + $0xb0] sm:$0xff] %v386
                  %v388 = vld [vmem:[%s340 + $0x158] sm:$0xff]
                  %389 = vst [vmem:[%s341 + $0xb8] sm:$0xff] %v388
                  %v390 = vld [vmem:[%s340 + $0x160] sm:$0xff]
                  %391 = vst [vmem:[%s341 + $0xc0] sm:$0xff] %v390
                  %v392 = vld [vmem:[%s340 + $0x190] sm:$0xff]
                  %393 = vst [vmem:[%s341 + $0xc8] sm:$0xff] %v392
                  %v394 = vld [vmem:[%s340 + $0x198] sm:$0xff]
                  %395 = vst [vmem:[%s341 + $0xd0] sm:$0xff] %v394
                  %v396 = vld [vmem:[%s340 + $0x1a0] sm:$0xff]
                  %397 = vst [vmem:[%s341 + $0xd8] sm:$0xff] %v396
                  %v398 = vld [vmem:[%s340 + $0x1a8] sm:$0xff]
                  %399 = vst [vmem:[%s341 + $0xe0] sm:$0xff] %v398
                  %v400 = vld [vmem:[%s340 + $0x1b0] sm:$0xff]
                  %401 = vst [vmem:[%s341 + $0xe8] sm:$0xff] %v400
                  %v402 = vld [vmem:[%s340 + $0x1e0] sm:$0xff]
                  %403 = vst [vmem:[%s341 + $0xf0] sm:$0xff] %v402
                  %v404 = vld [vmem:[%s340 + $0x1e8] sm:$0xff]
                  %405 = vst [vmem:[%s341 + $0xf8] sm:$0xff] %v404
                  %v406 = vld [vmem:[%s340 + $0x1f0] sm:$0xff]
                  %407 = vst [vmem:[%s341 + $0x100] sm:$0xff] %v406
                  %v408 = vld [vmem:[%s340 + $0x1f8] sm:$0xff]
                  %409 = vst [vmem:[%s341 + $0x108] sm:$0xff] %v408
                  %v410 = vld [vmem:[%s340 + $0x200] sm:$0xff]
                  %411 = vst [vmem:[%s341 + $0x110] sm:$0xff] %v410
                  %v412 = vld [vmem:[%s340 + $0x230] sm:$0xff]
                  %413 = vst [vmem:[%s341 + $0x118] sm:$0xff] %v412
                  %v414 = vld [vmem:[%s340 + $0x238] sm:$0xff]
                  %415 = vst [vmem:[%s341 + $0x120] sm:$0xff] %v414
                  %v416 = vld [vmem:[%s340 + $0x240] sm:$0xff]
                  %417 = vst [vmem:[%s341 + $0x128] sm:$0xff] %v416
                  %v418 = vld [vmem:[%s340 + $0x248] sm:$0xff]
                  %419 = vst [vmem:[%s341 + $0x130] sm:$0xff] %v418
                  %v420 = vld [vmem:[%s340 + $0x250] sm:$0xff]
                  %421 = vst [vmem:[%s341 + $0x138] sm:$0xff] %v420
                  %v422 = vld [vmem:[%s340 + $0x280] sm:$0xff]
                  %423 = vst [vmem:[%s341 + $0x140] sm:$0xff] %v422
                  %v424 = vld [vmem:[%s340 + $0x288] sm:$0xff]
                  %425 = vst [vmem:[%s341 + $0x148] sm:$0xff] %v424
                  %v426 = vld [vmem:[%s340 + $0x290] sm:$0xff]
                  %427 = vst [vmem:[%s341 + $0x150] sm:$0xff] %v426
                  %v428 = vld [vmem:[%s340 + $0x298] sm:$0xff]
                  %429 = vst [vmem:[%s341 + $0x158] sm:$0xff] %v428
                  %v430 = vld [vmem:[%s340 + $0x2a0] sm:$0xff]
                  %431 = vst [vmem:[%s341 + $0x160] sm:$0xff] %v430
                  %v432 = vld [vmem:[%s340 + $0x2d0] sm:$0xff]
                  %433 = vst [vmem:[%s341 + $0x168] sm:$0xff] %v432
                  %v434 = vld [vmem:[%s340 + $0x2d8] sm:$0xff]
                  %435 = vst [vmem:[%s341 + $0x170] sm:$0xff] %v434
                  %v436 = vld [vmem:[%s340 + $0x2e0] sm:$0xff]
                  %437 = vst [vmem:[%s341 + $0x178] sm:$0xff] %v436
                  %v438 = vld [vmem:[%s340 + $0x2e8] sm:$0xff]
                  %439 = vst [vmem:[%s341 + $0x180] sm:$0xff] %v438
                  %v440 = vld [vmem:[%s340 + $0x2f0] sm:$0xff]
                  %441 = vst [vmem:[%s341 + $0x188] sm:$0xff] %v440
                  %v442 = vld [vmem:[%s340 + $0x320] sm:$0xff]
                  %443 = vst [vmem:[%s341 + $0x190] sm:$0xff] %v442
                  %v444 = vld [vmem:[%s340 + $0x328] sm:$0xff]
                  %445 = vst [vmem:[%s341 + $0x198] sm:$0xff] %v444
                  %v446 = vld [vmem:[%s340 + $0x330] sm:$0xff]
                  %447 = vst [vmem:[%s341 + $0x1a0] sm:$0xff] %v446
                  %v448 = vld [vmem:[%s340 + $0x338] sm:$0xff]
                  %449 = vst [vmem:[%s341 + $0x1a8] sm:$0xff] %v448
                  %v450 = vld [vmem:[%s340 + $0x340] sm:$0xff]
                  %451 = vst [vmem:[%s341 + $0x1b0] sm:$0xff] %v450
                  %v452 = vld [vmem:[%s340 + $0x370] sm:$0xff]
                  %453 = vst [vmem:[%s341 + $0x1b8] sm:$0xff] %v452
                  %v454 = vld [vmem:[%s340 + $0x378] sm:$0xff]
                  %455 = vst [vmem:[%s341 + $0x1c0] sm:$0xff] %v454
                  %v456 = vld [vmem:[%s340 + $0x380] sm:$0xff]
                  %457 = vst [vmem:[%s341 + $0x1c8] sm:$0xff] %v456
                  %v458 = vld [vmem:[%s340 + $0x388] sm:$0xff]
                  %459 = vst [vmem:[%s341 + $0x1d0] sm:$0xff] %v458
                  %v460 = vld [vmem:[%s340 + $0x390] sm:$0xff]
                  %461 = vst [vmem:[%s341 + $0x1d8] sm:$0xff] %v460
                  %v462 = vld [vmem:[%s340 + $0x3c0] sm:$0xff]
                  %463 = vst [vmem:[%s341 + $0x1e0] sm:$0xff] %v462
                  %v464 = vld [vmem:[%s340 + $0x3c8] sm:$0xff]
                  %465 = vst [vmem:[%s341 + $0x1e8] sm:$0xff] %v464
                  %v466 = vld [vmem:[%s340 + $0x3d0] sm:$0xff]
                  %467 = vst [vmem:[%s341 + $0x1f0] sm:$0xff] %v466
                  %v468 = vld [vmem:[%s340 + $0x3d8] sm:$0xff]
                  %469 = vst [vmem:[%s341 + $0x1f8] sm:$0xff] %v468
                  %v470 = vld [vmem:[%s340 + $0x3e0] sm:$0xff]
                  %471 = vst [vmem:[%s341 + $0x200] sm:$0xff] %v470
                  %v472 = vld [vmem:[%s340 + $0x410] sm:$0xff]
                  %473 = vst [vmem:[%s341 + $0x208] sm:$0xff] %v472
                  %v474 = vld [vmem:[%s340 + $0x418] sm:$0xff]
                  %475 = vst [vmem:[%s341 + $0x210] sm:$0xff] %v474
                  %v476 = vld [vmem:[%s340 + $0x420] sm:$0xff]
                  %477 = vst [vmem:[%s341 + $0x218] sm:$0xff] %v476
                  %v478 = vld [vmem:[%s340 + $0x428] sm:$0xff]
                  %479 = vst [vmem:[%s341 + $0x220] sm:$0xff] %v478
                  %v480 = vld [vmem:[%s340 + $0x430] sm:$0xff]
                  %481 = vst [vmem:[%s341 + $0x228] sm:$0xff] %v480
                  %v482 = vld [vmem:[%s340 + $0x460] sm:$0xff]
                  %483 = vst [vmem:[%s341 + $0x230] sm:$0xff] %v482
                  %v484 = vld [vmem:[%s340 + $0x468] sm:$0xff]
                  %485 = vst [vmem:[%s341 + $0x238] sm:$0xff] %v484
                  %v486 = vld [vmem:[%s340 + $0x470] sm:$0xff]
                  %487 = vst [vmem:[%s341 + $0x240] sm:$0xff] %v486
                  %v488 = vld [vmem:[%s340 + $0x478] sm:$0xff]
                  %489 = vst [vmem:[%s341 + $0x248] sm:$0xff] %v488
                  %v490 = vld [vmem:[%s340 + $0x480] sm:$0xff]
                  %491 = vst [vmem:[%s341 + $0x250] sm:$0xff] %v490
                  %v492 = vld [vmem:[%s340 + $0x4b0] sm:$0xff]
                  %493 = vst [vmem:[%s341 + $0x258] sm:$0xff] %v492
                  %v494 = vld [vmem:[%s340 + $0x4b8] sm:$0xff]
                  %495 = vst [vmem:[%s341 + $0x260] sm:$0xff] %v494
                  %v496 = vld [vmem:[%s340 + $0x4c0] sm:$0xff]
                  %497 = vst [vmem:[%s341 + $0x268] sm:$0xff] %v496
                  %v498 = vld [vmem:[%s340 + $0x4c8] sm:$0xff]
                  %499 = vst [vmem:[%s341 + $0x270] sm:$0xff] %v498
                  %v500 = vld [vmem:[%s340 + $0x4d0] sm:$0xff]
                  %501 = vst [vmem:[%s341 + $0x278] sm:$0xff] %v500
                $region56: #{decoder_forward.3} parent=50 // loop_footer
                  %s339 = sadd.s32 1, %s335
                $region57: #{decoder_forward.3} parent=50 // loop_footer_branch
                  %334 = sbr.rel target = $region53
                $region58: #{decoder_forward.3} parent=50 // loop_exit
                  _
              $region51: #{decoder_forward.3} parent=35 // pred_fallthru
                _
              // Predicated region
              $region59: #{decoder_forward.3} parent=35 // pred_check
                _
              $region60: #{decoder_forward.3} parent=35 // pred_check_branch
                %503 = sbr.rel target = $region62
              $region61: #{decoder_forward.3} parent=35 // pred_region
                _
              $region62: #{decoder_forward.3} parent=35 // pred_fallthru
                _
            $region36: #{decoder_forward.3} parent=31 // pred_fallthru
              _
            // Predicated region
            $region37: #{decoder_forward.3} parent=31 // pred_check
              _
            $region38: #{decoder_forward.3} parent=31 // pred_check_branch
              %161 = sbr.rel target = $region40
            $region39: #{decoder_forward.3} parent=31 // pred_region
              %s163 = ssub.s32 256, 1
              loop: start=0, step=1, limit=1
              $region41: #{decoder_forward.3} parent=39 // loop_pre_header
                _
              $region42: #{decoder_forward.3} parent=39 // loop_header
                %s165 = sphi 0, %s169
                %p166 = scmp.ge.s32.totalorder %s165, 1
                %s170 = sphi %s155, %s155
                %s171 = sphi %s150, %s150
              $region43: #{decoder_forward.3} parent=39 // loop_header_branch
                %168 = sbr.rel (%p166) target = $region47
              $region44: #{decoder_forward.3} parent=39 // loop_body
                %v172 = vld [vmem:[%s170] sm:%s163]
                %173 = vst [vmem:[%s171] sm:%s163] %v172
                %v174 = vld [vmem:[%s170 + $0x8] sm:%s163]
                %175 = vst [vmem:[%s171 + $0x8] sm:%s163] %v174
                %v176 = vld [vmem:[%s170 + $0x10] sm:%s163]
                %177 = vst [vmem:[%s171 + $0x10] sm:%s163] %v176
                %v178 = vld [vmem:[%s170 + $0x18] sm:%s163]
                %179 = vst [vmem:[%s171 + $0x18] sm:%s163] %v178
                %v180 = vld [vmem:[%s170 + $0x20] sm:%s163]
                %181 = vst [vmem:[%s171 + $0x20] sm:%s163] %v180
                %v182 = vld [vmem:[%s170 + $0x50] sm:%s163]
                %183 = vst [vmem:[%s171 + $0x28] sm:%s163] %v182
                %v184 = vld [vmem:[%s170 + $0x58] sm:%s163]
                %185 = vst [vmem:[%s171 + $0x30] sm:%s163] %v184
                %v186 = vld [vmem:[%s170 + $0x60] sm:%s163]
                %187 = vst [vmem:[%s171 + $0x38] sm:%s163] %v186
                %v188 = vld [vmem:[%s170 + $0x68] sm:%s163]
                %189 = vst [vmem:[%s171 + $0x40] sm:%s163] %v188
                %v190 = vld [vmem:[%s170 + $0x70] sm:%s163]
                %191 = vst [vmem:[%s171 + $0x48] sm:%s163] %v190
                %v192 = vld [vmem:[%s170 + $0xa0] sm:%s163]
                %193 = vst [vmem:[%s171 + $0x50] sm:%s163] %v192
                %v194 = vld [vmem:[%s170 + $0xa8] sm:%s163]
                %195 = vst [vmem:[%s171 + $0x58] sm:%s163] %v194
                %v196 = vld [vmem:[%s170 + $0xb0] sm:%s163]
                %197 = vst [vmem:[%s171 + $0x60] sm:%s163] %v196
                %v198 = vld [vmem:[%s170 + $0xb8] sm:%s163]
                %199 = vst [vmem:[%s171 + $0x68] sm:%s163] %v198
                %v200 = vld [vmem:[%s170 + $0xc0] sm:%s163]
                %201 = vst [vmem:[%s171 + $0x70] sm:%s163] %v200
                %v202 = vld [vmem:[%s170 + $0xf0] sm:%s163]
                %203 = vst [vmem:[%s171 + $0x78] sm:%s163] %v202
                %v204 = vld [vmem:[%s170 + $0xf8] sm:%s163]
                %205 = vst [vmem:[%s171 + $0x80] sm:%s163] %v204
                %v206 = vld [vmem:[%s170 + $0x100] sm:%s163]
                %207 = vst [vmem:[%s171 + $0x88] sm:%s163] %v206
                %v208 = vld [vmem:[%s170 + $0x108] sm:%s163]
                %209 = vst [vmem:[%s171 + $0x90] sm:%s163] %v208
                %v210 = vld [vmem:[%s170 + $0x110] sm:%s163]
                %211 = vst [vmem:[%s171 + $0x98] sm:%s163] %v210
                %v212 = vld [vmem:[%s170 + $0x140] sm:%s163]
                %213 = vst [vmem:[%s171 + $0xa0] sm:%s163] %v212
                %v214 = vld [vmem:[%s170 + $0x148] sm:%s163]
                %215 = vst [vmem:[%s171 + $0xa8] sm:%s163] %v214
                %v216 = vld [vmem:[%s170 + $0x150] sm:%s163]
                %217 = vst [vmem:[%s171 + $0xb0] sm:%s163] %v216
                %v218 = vld [vmem:[%s170 + $0x158] sm:%s163]
                %219 = vst [vmem:[%s171 + $0xb8] sm:%s163] %v218
                %v220 = vld [vmem:[%s170 + $0x160] sm:%s163]
                %221 = vst [vmem:[%s171 + $0xc0] sm:%s163] %v220
                %v222 = vld [vmem:[%s170 + $0x190] sm:%s163]
                %223 = vst [vmem:[%s171 + $0xc8] sm:%s163] %v222
                %v224 = vld [vmem:[%s170 + $0x198] sm:%s163]
                %225 = vst [vmem:[%s171 + $0xd0] sm:%s163] %v224
                %v226 = vld [vmem:[%s170 + $0x1a0] sm:%s163]
                %227 = vst [vmem:[%s171 + $0xd8] sm:%s163] %v226
                %v228 = vld [vmem:[%s170 + $0x1a8] sm:%s163]
                %229 = vst [vmem:[%s171 + $0xe0] sm:%s163] %v228
                %v230 = vld [vmem:[%s170 + $0x1b0] sm:%s163]
                %231 = vst [vmem:[%s171 + $0xe8] sm:%s163] %v230
                %v232 = vld [vmem:[%s170 + $0x1e0] sm:%s163]
                %233 = vst [vmem:[%s171 + $0xf0] sm:%s163] %v232
                %v234 = vld [vmem:[%s170 + $0x1e8] sm:%s163]
                %235 = vst [vmem:[%s171 + $0xf8] sm:%s163] %v234
                %v236 = vld [vmem:[%s170 + $0x1f0] sm:%s163]
                %237 = vst [vmem:[%s171 + $0x100] sm:%s163] %v236
                %v238 = vld [vmem:[%s170 + $0x1f8] sm:%s163]
                %239 = vst [vmem:[%s171 + $0x108] sm:%s163] %v238
                %v240 = vld [vmem:[%s170 + $0x200] sm:%s163]
                %241 = vst [vmem:[%s171 + $0x110] sm:%s163] %v240
                %v242 = vld [vmem:[%s170 + $0x230] sm:%s163]
                %243 = vst [vmem:[%s171 + $0x118] sm:%s163] %v242
                %v244 = vld [vmem:[%s170 + $0x238] sm:%s163]
                %245 = vst [vmem:[%s171 + $0x120] sm:%s163] %v244
                %v246 = vld [vmem:[%s170 + $0x240] sm:%s163]
                %247 = vst [vmem:[%s171 + $0x128] sm:%s163] %v246
                %v248 = vld [vmem:[%s170 + $0x248] sm:%s163]
                %249 = vst [vmem:[%s171 + $0x130] sm:%s163] %v248
                %v250 = vld [vmem:[%s170 + $0x250] sm:%s163]
                %251 = vst [vmem:[%s171 + $0x138] sm:%s163] %v250
                %v252 = vld [vmem:[%s170 + $0x280] sm:%s163]
                %253 = vst [vmem:[%s171 + $0x140] sm:%s163] %v252
                %v254 = vld [vmem:[%s170 + $0x288] sm:%s163]
                %255 = vst [vmem:[%s171 + $0x148] sm:%s163] %v254
                %v256 = vld [vmem:[%s170 + $0x290] sm:%s163]
                %257 = vst [vmem:[%s171 + $0x150] sm:%s163] %v256
                %v258 = vld [vmem:[%s170 + $0x298] sm:%s163]
                %259 = vst [vmem:[%s171 + $0x158] sm:%s163] %v258
                %v260 = vld [vmem:[%s170 + $0x2a0] sm:%s163]
                %261 = vst [vmem:[%s171 + $0x160] sm:%s163] %v260
                %v262 = vld [vmem:[%s170 + $0x2d0] sm:%s163]
                %263 = vst [vmem:[%s171 + $0x168] sm:%s163] %v262
                %v264 = vld [vmem:[%s170 + $0x2d8] sm:%s163]
                %265 = vst [vmem:[%s171 + $0x170] sm:%s163] %v264
                %v266 = vld [vmem:[%s170 + $0x2e0] sm:%s163]
                %267 = vst [vmem:[%s171 + $0x178] sm:%s163] %v266
                %v268 = vld [vmem:[%s170 + $0x2e8] sm:%s163]
                %269 = vst [vmem:[%s171 + $0x180] sm:%s163] %v268
                %v270 = vld [vmem:[%s170 + $0x2f0] sm:%s163]
                %271 = vst [vmem:[%s171 + $0x188] sm:%s163] %v270
                %v272 = vld [vmem:[%s170 + $0x320] sm:%s163]
                %273 = vst [vmem:[%s171 + $0x190] sm:%s163] %v272
                %v274 = vld [vmem:[%s170 + $0x328] sm:%s163]
                %275 = vst [vmem:[%s171 + $0x198] sm:%s163] %v274
                %v276 = vld [vmem:[%s170 + $0x330] sm:%s163]
                %277 = vst [vmem:[%s171 + $0x1a0] sm:%s163] %v276
                %v278 = vld [vmem:[%s170 + $0x338] sm:%s163]
                %279 = vst [vmem:[%s171 + $0x1a8] sm:%s163] %v278
                %v280 = vld [vmem:[%s170 + $0x340] sm:%s163]
                %281 = vst [vmem:[%s171 + $0x1b0] sm:%s163] %v280
                %v282 = vld [vmem:[%s170 + $0x370] sm:%s163]
                %283 = vst [vmem:[%s171 + $0x1b8] sm:%s163] %v282
                %v284 = vld [vmem:[%s170 + $0x378] sm:%s163]
                %285 = vst [vmem:[%s171 + $0x1c0] sm:%s163] %v284
                %v286 = vld [vmem:[%s170 + $0x380] sm:%s163]
                %287 = vst [vmem:[%s171 + $0x1c8] sm:%s163] %v286
                %v288 = vld [vmem:[%s170 + $0x388] sm:%s163]
                %289 = vst [vmem:[%s171 + $0x1d0] sm:%s163] %v288
                %v290 = vld [vmem:[%s170 + $0x390] sm:%s163]
                %291 = vst [vmem:[%s171 + $0x1d8] sm:%s163] %v290
                %v292 = vld [vmem:[%s170 + $0x3c0] sm:%s163]
                %293 = vst [vmem:[%s171 + $0x1e0] sm:%s163] %v292
                %v294 = vld [vmem:[%s170 + $0x3c8] sm:%s163]
                %295 = vst [vmem:[%s171 + $0x1e8] sm:%s163] %v294
                %v296 = vld [vmem:[%s170 + $0x3d0] sm:%s163]
                %297 = vst [vmem:[%s171 + $0x1f0] sm:%s163] %v296
                %v298 = vld [vmem:[%s170 + $0x3d8] sm:%s163]
                %299 = vst [vmem:[%s171 + $0x1f8] sm:%s163] %v298
                %v300 = vld [vmem:[%s170 + $0x3e0] sm:%s163]
                %301 = vst [vmem:[%s171 + $0x200] sm:%s163] %v300
                %v302 = vld [vmem:[%s170 + $0x410] sm:%s163]
                %303 = vst [vmem:[%s171 + $0x208] sm:%s163] %v302
                %v304 = vld [vmem:[%s170 + $0x418] sm:%s163]
                %305 = vst [vmem:[%s171 + $0x210] sm:%s163] %v304
                %v306 = vld [vmem:[%s170 + $0x420] sm:%s163]
                %307 = vst [vmem:[%s171 + $0x218] sm:%s163] %v306
                %v308 = vld [vmem:[%s170 + $0x428] sm:%s163]
                %309 = vst [vmem:[%s171 + $0x220] sm:%s163] %v308
                %v310 = vld [vmem:[%s170 + $0x430] sm:%s163]
                %311 = vst [vmem:[%s171 + $0x228] sm:%s163] %v310
                %v312 = vld [vmem:[%s170 + $0x460] sm:%s163]
                %313 = vst [vmem:[%s171 + $0x230] sm:%s163] %v312
                %v314 = vld [vmem:[%s170 + $0x468] sm:%s163]
                %315 = vst [vmem:[%s171 + $0x238] sm:%s163] %v314
                %v316 = vld [vmem:[%s170 + $0x470] sm:%s163]
                %317 = vst [vmem:[%s171 + $0x240] sm:%s163] %v316
                %v318 = vld [vmem:[%s170 + $0x478] sm:%s163]
                %319 = vst [vmem:[%s171 + $0x248] sm:%s163] %v318
                %v320 = vld [vmem:[%s170 + $0x480] sm:%s163]
                %321 = vst [vmem:[%s171 + $0x250] sm:%s163] %v320
                %v322 = vld [vmem:[%s170 + $0x4b0] sm:%s163]
                %323 = vst [vmem:[%s171 + $0x258] sm:%s163] %v322
                %v324 = vld [vmem:[%s170 + $0x4b8] sm:%s163]
                %325 = vst [vmem:[%s171 + $0x260] sm:%s163] %v324
                %v326 = vld [vmem:[%s170 + $0x4c0] sm:%s163]
                %327 = vst [vmem:[%s171 + $0x268] sm:%s163] %v326
                %v328 = vld [vmem:[%s170 + $0x4c8] sm:%s163]
                %329 = vst [vmem:[%s171 + $0x270] sm:%s163] %v328
                %v330 = vld [vmem:[%s170 + $0x4d0] sm:%s163]
                %331 = vst [vmem:[%s171 + $0x278] sm:%s163] %v330
              $region45: #{decoder_forward.3} parent=39 // loop_footer
                %s169 = sadd.s32 1, %s165
              $region46: #{decoder_forward.3} parent=39 // loop_footer_branch
                %164 = sbr.rel target = $region42
              $region47: #{decoder_forward.3} parent=39 // loop_exit
                _
            $region40: #{decoder_forward.3} parent=31 // pred_fallthru
              _
          $region32: #{decoder_forward.3} parent=27 // pred_fallthru
            _
          %504 = vnop
        $region28: #{decoder_forward.3} parent=23 // pred_fallthru
          _
      $region24: #{decoder_forward.3} parent=5 // pred_fallthru
        _
      %p505 = scmp.le.s32.totalorder 1, %s9
      %p506 = scmp.lt.s32.totalorder %s9, 3
      %p507 = pnand %p505, %p506
      %p508 = pneg %p507
      // Predicated region
      $region63: #{decoder_forward.3} parent=5 // pred_check
        _
      $region64: #{decoder_forward.3} parent=5 // pred_check_branch
        %510 = sbr.rel (%p507) target = $region66
      $region65: #{decoder_forward.3} parent=5 // pred_region
        %s511 = ssub.s32 %s9, 1
        %s512 = sand.u32 %s36, 1
        %s513 = sand.u32 %s36, 1
        %s514 = smul.addr %s513, 640
        %s515 = scalar_lea.vmem [#allocation2], %s514
        // Predicated region
        $region67: #{decoder_forward.3} parent=65 // pred_check
          %p516 = pneg %p49
        $region68: #{decoder_forward.3} parent=65 // pred_check_branch
          %518 = sbr.rel (%p516) target = $region70
        $region69: #{decoder_forward.3} parent=65 // pred_region
          _
        $region70: #{decoder_forward.3} parent=65 // pred_fallthru
          _
        %s519 = sand.u32 %s36, 1
        %s520 = sand.u32 %s36, 1
        %s521 = smul.addr %s520, 640
        %s522 = scalar_lea.vmem [#allocation2], %s521
        %p523 = pneg %p49
        %p524 = pneg %p46
        %p525 = pneg %p70
        %p526 = pneg %p67
        %p527 = pneg %p91
        %p528 = pneg %p88
        %p529 = pneg %p119
        %p530 = pneg %p116
        %s531 = smul.u32 4, %s19
        %p532 = scmp.lt.s32.totalorder %s18, 1
        %s533 = scalar_select %p532, %s18, 1
        %p534 = scmp.lt.s32.totalorder %s531, 3
        %s535 = scalar_select %p534, %s531, 3
        %s536 = smul.addr %s533, 64
        %s537 = sadd.s32 %s535, %s536
        %s538 = smul.addr %s537, 8
        %s539 = scalar_lea.vmem %s3, %s538
        %s540 = smul.u32 5, %s19
        %s541 = smul.u32 4, %s19
        %p542 = scmp.lt.s32.totalorder %s18, 1
        %s543 = scalar_select %p542, %s18, 1
        %p544 = scmp.lt.s32.totalorder %s541, 3
        %s545 = scalar_select %p544, %s541, 3
        %s546 = smul.addr %s543, 64
        %s547 = sadd.s32 %s545, %s546
        %s548 = smul.addr %s547, 8
        %s549 = scalar_lea.vmem %s3, %s548
        %s550 = smul.u32 4, %s19
        %v551 = vld [vmem:[%s515] sm:$0xff]
        %v552 = vld [vmem:[%s515 + $0x8] sm:$0xff]
        %v553 = vld [vmem:[%s515 + $0x10] sm:$0xff]
        %v554 = vld [vmem:[%s515 + $0x18] sm:$0x7f]
        %v555 = vld [vmem:[%s515 + $0x28] sm:$0xff]
        %v556 = vld [vmem:[%s515 + $0x30] sm:$0xff]
        %v557 = vld [vmem:[%s515 + $0x38] sm:$0xff]
        %v558 = vld [vmem:[%s515 + $0x40] sm:$0x7f]
        %v559 = vld [vmem:[%s515 + $0x50] sm:$0xff]
        %v560 = vld [vmem:[%s515 + $0x58] sm:$0xff]
        %v561 = vld [vmem:[%s515 + $0x60] sm:$0xff]
        %v562 = vld [vmem:[%s515 + $0x68] sm:$0x7f]
        %v563 = vld [vmem:[%s515 + $0x78] sm:$0xff]
        %v564 = vld [vmem:[%s515 + $0x80] sm:$0xff]
        %v565 = vld [vmem:[%s515 + $0x88] sm:$0xff]
        %v566 = vld [vmem:[%s515 + $0x90] sm:$0x7f]
        %v567 = vld [vmem:[%s515 + $0xa0] sm:$0xff]
        %v568 = vld [vmem:[%s515 + $0xa8] sm:$0xff]
        %v569 = vld [vmem:[%s515 + $0xb0] sm:$0xff]
        %v570 = vld [vmem:[%s515 + $0xb8] sm:$0x7f]
        %v571 = vld [vmem:[%s515 + $0xc8] sm:$0xff]
        %v572 = vld [vmem:[%s515 + $0xd0] sm:$0xff]
        %v573 = vld [vmem:[%s515 + $0xd8] sm:$0xff]
        %v574 = vld [vmem:[%s515 + $0xe0] sm:$0x7f]
        %v575 = vld [vmem:[%s515 + $0xf0] sm:$0xff]
        %v576 = vld [vmem:[%s515 + $0xf8] sm:$0xff]
        %v577 = vld [vmem:[%s515 + $0x100] sm:$0xff]
        %v578 = vld [vmem:[%s515 + $0x108] sm:$0x7f]
        %v579 = vld [vmem:[%s515 + $0x118] sm:$0xff]
        %v580 = vld [vmem:[%s515 + $0x120] sm:$0xff]
        %v581 = vld [vmem:[%s515 + $0x128] sm:$0xff]
        %v582 = vld [vmem:[%s515 + $0x130] sm:$0x7f]
        %v583 = vld [vmem:[%s515 + $0x140] sm:$0xff]
        %v584 = vld [vmem:[%s515 + $0x148] sm:$0xff]
        %v585 = vld [vmem:[%s515 + $0x150] sm:$0xff]
        %v586 = vld [vmem:[%s515 + $0x158] sm:$0x7f]
        %v587 = vld [vmem:[%s515 + $0x168] sm:$0xff]
        %v588 = vld [vmem:[%s515 + $0x170] sm:$0xff]
        %v589 = vld [vmem:[%s515 + $0x178] sm:$0xff]
        %v590 = vld [vmem:[%s515 + $0x180] sm:$0x7f]
        %v591 = vld [vmem:[%s515 + $0x190] sm:$0xff]
        %v592 = vld [vmem:[%s515 + $0x198] sm:$0xff]
        %v593 = vld [vmem:[%s515 + $0x1a0] sm:$0xff]
        %v594 = vld [vmem:[%s515 + $0x1a8] sm:$0x7f]
        %v595 = vld [vmem:[%s515 + $0x1b8] sm:$0xff]
        %v596 = vld [vmem:[%s515 + $0x1c0] sm:$0xff]
        %v597 = vld [vmem:[%s515 + $0x1c8] sm:$0xff]
        %v598 = vld [vmem:[%s515 + $0x1d0] sm:$0x7f]
        %v599 = vld [vmem:[%s515 + $0x1e0] sm:$0xff]
        %v600 = vld [vmem:[%s515 + $0x1e8] sm:$0xff]
        %v601 = vld [vmem:[%s515 + $0x1f0] sm:$0xff]
        %v602 = vld [vmem:[%s515 + $0x1f8] sm:$0x7f]
        %v603 = vld [vmem:[%s515 + $0x208] sm:$0xff]
        %v604 = vld [vmem:[%s515 + $0x210] sm:$0xff]
        %v605 = vld [vmem:[%s515 + $0x218] sm:$0xff]
        %v606 = vld [vmem:[%s515 + $0x220] sm:$0x7f]
        %v607 = vld [vmem:[%s515 + $0x230] sm:$0xff]
        %v608 = vld [vmem:[%s515 + $0x238] sm:$0xff]
        %v609 = vld [vmem:[%s515 + $0x240] sm:$0xff]
        %v610 = vld [vmem:[%s515 + $0x248] sm:$0x7f]
        %v611 = vld [vmem:[%s515 + $0x258] sm:$0xff]
        %v612 = vld [vmem:[%s515 + $0x260] sm:$0xff]
        %v613 = vld [vmem:[%s515 + $0x268] sm:$0xff]
        %v614 = vld [vmem:[%s515 + $0x270] sm:$0x7f]
        %v615 = vld [vmem:[%s1] sm:$0x1]
        %v616 = vld [vmem:[%s1 + $0x1] sm:$0x1]
        %v617 = vld [vmem:[%s1 + $0x2] sm:$0x1]
        %v618 = vld [vmem:[%s1 + $0x3] sm:$0x1]
        %v619 = vld [vmem:[%s1 + $0x4] sm:$0x1]
        %v620 = vld [vmem:[%s1 + $0x5] sm:$0x1]
        %v621 = vld [vmem:[%s1 + $0x6] sm:$0x1]
        %v622 = vld [vmem:[%s1 + $0x7] sm:$0x1]
        %v623 = vld [vmem:[%s1 + $0x8] sm:$0x1]
        %v624 = vld [vmem:[%s1 + $0x9] sm:$0x1]
        %v625 = vld [vmem:[%s1 + $0xa] sm:$0x1]
        %v626 = vld [vmem:[%s1 + $0xb] sm:$0x1]
        %v627 = vld [vmem:[%s1 + $0xc] sm:$0x1]
        %v628 = vld [vmem:[%s1 + $0xd] sm:$0x1]
        %v629 = vld [vmem:[%s1 + $0xe] sm:$0x1]
        %v630 = vld [vmem:[%s1 + $0xf] sm:$0x1]
        %v647 = vperm.slane %v615, 0
        %v648 = vperm.slane %v616, 0
        %v649 = vperm.slane %v617, 0
        %v650 = vperm.slane %v618, 0
        %v651 = vperm.slane %v619, 0
        %v652 = vperm.slane %v620, 0
        %v653 = vperm.slane %v621, 0
        %v654 = vperm.slane %v622, 0
        %v655 = vperm.slane %v623, 0
        %v656 = vperm.slane %v624, 0
        %v657 = vperm.slane %v625, 0
        %v658 = vperm.slane %v626, 0
        %v659 = vperm.slane %v627, 0
        %v660 = vperm.slane %v628, 0
        %v661 = vperm.slane %v629, 0
        %v662 = vperm.slane %v630, 0
        %663 = vset.pattern.permute.xlu0 0
        %664 = vperm.xlu0 %663, %v647
        %v665 = vpop.permute.xlu0 %664
        %667 = vset.pattern.permute.xlu0 0
        %668 = vperm.xlu0 %667, %v648
        %v669 = vpop.permute.xlu0 %668
        %671 = vset.pattern.permute.xlu0 0
        %672 = vperm.xlu0 %671, %v649
        %v673 = vpop.permute.xlu0 %672
        %675 = vset.pattern.permute.xlu0 0
        %676 = vperm.xlu0 %675, %v650
        %v677 = vpop.permute.xlu0 %676
        %679 = vset.pattern.permute.xlu0 0
        %680 = vperm.xlu0 %679, %v651
        %v681 = vpop.permute.xlu0 %680
        %683 = vset.pattern.permute.xlu0 0
        %684 = vperm.xlu0 %683, %v652
        %v685 = vpop.permute.xlu0 %684
        %687 = vset.pattern.permute.xlu0 0
        %688 = vperm.xlu0 %687, %v653
        %v689 = vpop.permute.xlu0 %688
        %691 = vset.pattern.permute.xlu0 0
        %692 = vperm.xlu0 %691, %v654
        %v693 = vpop.permute.xlu0 %692
        %695 = vset.pattern.permute.xlu0 0
        %696 = vperm.xlu0 %695, %v655
        %v697 = vpop.permute.xlu0 %696
        %699 = vset.pattern.permute.xlu0 0
        %700 = vperm.xlu0 %699, %v656
        %v701 = vpop.permute.xlu0 %700
        %703 = vset.pattern.permute.xlu0 0
        %704 = vperm.xlu0 %703, %v657
        %v705 = vpop.permute.xlu0 %704
        %707 = vset.pattern.permute.xlu0 0
        %708 = vperm.xlu0 %707, %v658
        %v709 = vpop.permute.xlu0 %708
        %711 = vset.pattern.permute.xlu0 0
        %712 = vperm.xlu0 %711, %v659
        %v713 = vpop.permute.xlu0 %712
        %715 = vset.pattern.permute.xlu0 0
        %716 = vperm.xlu0 %715, %v660
        %v717 = vpop.permute.xlu0 %716
        %719 = vset.pattern.permute.xlu0 0
        %720 = vperm.xlu0 %719, %v661
        %v721 = vpop.permute.xlu0 %720
        %723 = vset.pattern.permute.xlu0 0
        %724 = vperm.xlu0 %723, %v662
        %v725 = vpop.permute.xlu0 %724
        %v727 = vmul.f32 %v551, %v665
        %v728 = vmul.f32 %v552, %v665
        %v729 = vmul.f32 %v553, %v665
        %v730 = vmul.f32 %v554, %v665
        %v731 = vmul.f32 %v555, %v669
        %v732 = vmul.f32 %v556, %v669
        %v733 = vmul.f32 %v557, %v669
        %v734 = vmul.f32 %v558, %v669
        %v735 = vmul.f32 %v559, %v673
        %v736 = vmul.f32 %v560, %v673
        %v737 = vmul.f32 %v561, %v673
        %v738 = vmul.f32 %v562, %v673
        %v739 = vmul.f32 %v563, %v677
        %v740 = vmul.f32 %v564, %v677
        %v741 = vmul.f32 %v565, %v677
        %v742 = vmul.f32 %v566, %v677
        %v743 = vmul.f32 %v567, %v681
        %v744 = vmul.f32 %v568, %v681
        %v745 = vmul.f32 %v569, %v681
        %v746 = vmul.f32 %v570, %v681
        %v747 = vmul.f32 %v571, %v685
        %v748 = vmul.f32 %v572, %v685
        %v749 = vmul.f32 %v573, %v685
        %v750 = vmul.f32 %v574, %v685
        %v751 = vmul.f32 %v575, %v689
        %v752 = vmul.f32 %v576, %v689
        %v753 = vmul.f32 %v577, %v689
        %v754 = vmul.f32 %v578, %v689
        %v755 = vmul.f32 %v579, %v693
        %v756 = vmul.f32 %v580, %v693
        %v757 = vmul.f32 %v581, %v693
        %v758 = vmul.f32 %v582, %v693
        %v759 = vmul.f32 %v583, %v697
        %v760 = vmul.f32 %v584, %v697
        %v761 = vmul.f32 %v585, %v697
        %v762 = vmul.f32 %v586, %v697
        %v763 = vmul.f32 %v587, %v701
        %v764 = vmul.f32 %v588, %v701
        %v765 = vmul.f32 %v589, %v701
        %v766 = vmul.f32 %v590, %v701
        %v767 = vmul.f32 %v591, %v705
        %v768 = vmul.f32 %v592, %v705
        %v769 = vmul.f32 %v593, %v705
        %v770 = vmul.f32 %v594, %v705
        %v771 = vmul.f32 %v595, %v709
        %v772 = vmul.f32 %v596, %v709
        %v773 = vmul.f32 %v597, %v709
        %v774 = vmul.f32 %v598, %v709
        %v775 = vmul.f32 %v599, %v713
        %v776 = vmul.f32 %v600, %v713
        %v777 = vmul.f32 %v601, %v713
        %v778 = vmul.f32 %v602, %v713
        %v779 = vmul.f32 %v603, %v717
        %v780 = vmul.f32 %v604, %v717
        %v781 = vmul.f32 %v605, %v717
        %v782 = vmul.f32 %v606, %v717
        %v783 = vmul.f32 %v607, %v721
        %v784 = vmul.f32 %v608, %v721
        %v785 = vmul.f32 %v609, %v721
        %v786 = vmul.f32 %v610, %v721
        %v787 = vmul.f32 %v611, %v725
        %v788 = vmul.f32 %v612, %v725
        %v789 = vmul.f32 %v613, %v725
        %v790 = vmul.f32 %v614, %v725
        %v791 = vld [vmem:[%s2] sm:$0x1]
        %v792 = vld [vmem:[%s2 + $0x1] sm:$0x1]
        %v793 = vld [vmem:[%s2 + $0x2] sm:$0x1]
        %v794 = vld [vmem:[%s2 + $0x3] sm:$0x1]
        %v795 = vld [vmem:[%s2 + $0x4] sm:$0x1]
        %v796 = vld [vmem:[%s2 + $0x5] sm:$0x1]
        %v797 = vld [vmem:[%s2 + $0x6] sm:$0x1]
        %v798 = vld [vmem:[%s2 + $0x7] sm:$0x1]
        %v799 = vld [vmem:[%s2 + $0x8] sm:$0x1]
        %v800 = vld [vmem:[%s2 + $0x9] sm:$0x1]
        %v801 = vld [vmem:[%s2 + $0xa] sm:$0x1]
        %v802 = vld [vmem:[%s2 + $0xb] sm:$0x1]
        %v803 = vld [vmem:[%s2 + $0xc] sm:$0x1]
        %v804 = vld [vmem:[%s2 + $0xd] sm:$0x1]
        %v805 = vld [vmem:[%s2 + $0xe] sm:$0x1]
        %v806 = vld [vmem:[%s2 + $0xf] sm:$0x1]
        %v823 = vperm.slane %v791, 0
        %v824 = vperm.slane %v792, 0
        %v825 = vperm.slane %v793, 0
        %v826 = vperm.slane %v794, 0
        %v827 = vperm.slane %v795, 0
        %v828 = vperm.slane %v796, 0
        %v829 = vperm.slane %v797, 0
        %v830 = vperm.slane %v798, 0
        %v831 = vperm.slane %v799, 0
        %v832 = vperm.slane %v800, 0
        %v833 = vperm.slane %v801, 0
        %v834 = vperm.slane %v802, 0
        %v835 = vperm.slane %v803, 0
        %v836 = vperm.slane %v804, 0
        %v837 = vperm.slane %v805, 0
        %v838 = vperm.slane %v806, 0
        %839 = vset.pattern.permute.xlu0 0
        %840 = vperm.xlu0 %839, %v823
        %v841 = vpop.permute.xlu0 %840
        %843 = vset.pattern.permute.xlu0 0
        %844 = vperm.xlu0 %843, %v824
        %v845 = vpop.permute.xlu0 %844
        %847 = vset.pattern.permute.xlu0 0
        %848 = vperm.xlu0 %847, %v825
        %v849 = vpop.permute.xlu0 %848
        %851 = vset.pattern.permute.xlu0 0
        %852 = vperm.xlu0 %851, %v826
        %v853 = vpop.permute.xlu0 %852
        %855 = vset.pattern.permute.xlu0 0
        %856 = vperm.xlu0 %855, %v827
        %v857 = vpop.permute.xlu0 %856
        %859 = vset.pattern.permute.xlu0 0
        %860 = vperm.xlu0 %859, %v828
        %v861 = vpop.permute.xlu0 %860
        %863 = vset.pattern.permute.xlu0 0
        %864 = vperm.xlu0 %863, %v829
        %v865 = vpop.permute.xlu0 %864
        %867 = vset.pattern.permute.xlu0 0
        %868 = vperm.xlu0 %867, %v830
        %v869 = vpop.permute.xlu0 %868
        %871 = vset.pattern.permute.xlu0 0
        %872 = vperm.xlu0 %871, %v831
        %v873 = vpop.permute.xlu0 %872
        %875 = vset.pattern.permute.xlu0 0
        %876 = vperm.xlu0 %875, %v832
        %v877 = vpop.permute.xlu0 %876
        %879 = vset.pattern.permute.xlu0 0
        %880 = vperm.xlu0 %879, %v833
        %v881 = vpop.permute.xlu0 %880
        %883 = vset.pattern.permute.xlu0 0
        %884 = vperm.xlu0 %883, %v834
        %v885 = vpop.permute.xlu0 %884
        %887 = vset.pattern.permute.xlu0 0
        %888 = vperm.xlu0 %887, %v835
        %v889 = vpop.permute.xlu0 %888
        %891 = vset.pattern.permute.xlu0 0
        %892 = vperm.xlu0 %891, %v836
        %v893 = vpop.permute.xlu0 %892
        %895 = vset.pattern.permute.xlu0 0
        %896 = vperm.xlu0 %895, %v837
        %v897 = vpop.permute.xlu0 %896
        %899 = vset.pattern.permute.xlu0 0
        %900 = vperm.xlu0 %899, %v838
        %v901 = vpop.permute.xlu0 %900
        %v903 = vadd.f32 %v727, %v841
        %v904 = vadd.f32 %v728, %v841
        %v905 = vadd.f32 %v729, %v841
        %v906 = vadd.f32 %v730, %v841
        %v907 = vadd.f32 %v731, %v845
        %v908 = vadd.f32 %v732, %v845
        %v909 = vadd.f32 %v733, %v845
        %v910 = vadd.f32 %v734, %v845
        %v911 = vadd.f32 %v735, %v849
        %v912 = vadd.f32 %v736, %v849
        %v913 = vadd.f32 %v737, %v849
        %v914 = vadd.f32 %v738, %v849
        %v915 = vadd.f32 %v739, %v853
        %v916 = vadd.f32 %v740, %v853
        %v917 = vadd.f32 %v741, %v853
        %v918 = vadd.f32 %v742, %v853
        %v919 = vadd.f32 %v743, %v857
        %v920 = vadd.f32 %v744, %v857
        %v921 = vadd.f32 %v745, %v857
        %v922 = vadd.f32 %v746, %v857
        %v923 = vadd.f32 %v747, %v861
        %v924 = vadd.f32 %v748, %v861
        %v925 = vadd.f32 %v749, %v861
        %v926 = vadd.f32 %v750, %v861
        %v927 = vadd.f32 %v751, %v865
        %v928 = vadd.f32 %v752, %v865
        %v929 = vadd.f32 %v753, %v865
        %v930 = vadd.f32 %v754, %v865
        %v931 = vadd.f32 %v755, %v869
        %v932 = vadd.f32 %v756, %v869
        %v933 = vadd.f32 %v757, %v869
        %v934 = vadd.f32 %v758, %v869
        %v935 = vadd.f32 %v759, %v873
        %v936 = vadd.f32 %v760, %v873
        %v937 = vadd.f32 %v761, %v873
        %v938 = vadd.f32 %v762, %v873
        %v939 = vadd.f32 %v763, %v877
        %v940 = vadd.f32 %v764, %v877
        %v941 = vadd.f32 %v765, %v877
        %v942 = vadd.f32 %v766, %v877
        %v943 = vadd.f32 %v767, %v881
        %v944 = vadd.f32 %v768, %v881
        %v945 = vadd.f32 %v769, %v881
        %v946 = vadd.f32 %v770, %v881
        %v947 = vadd.f32 %v771, %v885
        %v948 = vadd.f32 %v772, %v885
        %v949 = vadd.f32 %v773, %v885
        %v950 = vadd.f32 %v774, %v885
        %v951 = vadd.f32 %v775, %v889
        %v952 = vadd.f32 %v776, %v889
        %v953 = vadd.f32 %v777, %v889
        %v954 = vadd.f32 %v778, %v889
        %v955 = vadd.f32 %v779, %v893
        %v956 = vadd.f32 %v780, %v893
        %v957 = vadd.f32 %v781, %v893
        %v958 = vadd.f32 %v782, %v893
        %v959 = vadd.f32 %v783, %v897
        %v960 = vadd.f32 %v784, %v897
        %v961 = vadd.f32 %v785, %v897
        %v962 = vadd.f32 %v786, %v897
        %v963 = vadd.f32 %v787, %v901
        %v964 = vadd.f32 %v788, %v901
        %v965 = vadd.f32 %v789, %v901
        %v966 = vadd.f32 %v790, %v901
        %vm967 = vcmp.ge.f32.partialorder %v903, 0.0
        %vm968 = vcmp.ge.f32.partialorder %v904, 0.0
        %vm969 = vcmp.ge.f32.partialorder %v905, 0.0
        %vm970 = vcmp.ge.f32.partialorder %v906, 0.0
        %vm971 = vcmp.ge.f32.partialorder %v907, 0.0
        %vm972 = vcmp.ge.f32.partialorder %v908, 0.0
        %vm973 = vcmp.ge.f32.partialorder %v909, 0.0
        %vm974 = vcmp.ge.f32.partialorder %v910, 0.0
        %vm975 = vcmp.ge.f32.partialorder %v911, 0.0
        %vm976 = vcmp.ge.f32.partialorder %v912, 0.0
        %vm977 = vcmp.ge.f32.partialorder %v913, 0.0
        %vm978 = vcmp.ge.f32.partialorder %v914, 0.0
        %vm979 = vcmp.ge.f32.partialorder %v915, 0.0
        %vm980 = vcmp.ge.f32.partialorder %v916, 0.0
        %vm981 = vcmp.ge.f32.partialorder %v917, 0.0
        %vm982 = vcmp.ge.f32.partialorder %v918, 0.0
        %vm983 = vcmp.ge.f32.partialorder %v919, 0.0
        %vm984 = vcmp.ge.f32.partialorder %v920, 0.0
        %vm985 = vcmp.ge.f32.partialorder %v921, 0.0
        %vm986 = vcmp.ge.f32.partialorder %v922, 0.0
        %vm987 = vcmp.ge.f32.partialorder %v923, 0.0
        %vm988 = vcmp.ge.f32.partialorder %v924, 0.0
        %vm989 = vcmp.ge.f32.partialorder %v925, 0.0
        %vm990 = vcmp.ge.f32.partialorder %v926, 0.0
        %vm991 = vcmp.ge.f32.partialorder %v927, 0.0
        %vm992 = vcmp.ge.f32.partialorder %v928, 0.0
        %vm993 = vcmp.ge.f32.partialorder %v929, 0.0
        %vm994 = vcmp.ge.f32.partialorder %v930, 0.0
        %vm995 = vcmp.ge.f32.partialorder %v931, 0.0
        %vm996 = vcmp.ge.f32.partialorder %v932, 0.0
        %vm997 = vcmp.ge.f32.partialorder %v933, 0.0
        %vm998 = vcmp.ge.f32.partialorder %v934, 0.0
        %vm999 = vcmp.ge.f32.partialorder %v935, 0.0
        %vm1000 = vcmp.ge.f32.partialorder %v936, 0.0
        %vm1001 = vcmp.ge.f32.partialorder %v937, 0.0
        %vm1002 = vcmp.ge.f32.partialorder %v938, 0.0
        %vm1003 = vcmp.ge.f32.partialorder %v939, 0.0
        %vm1004 = vcmp.ge.f32.partialorder %v940, 0.0
        %vm1005 = vcmp.ge.f32.partialorder %v941, 0.0
        %vm1006 = vcmp.ge.f32.partialorder %v942, 0.0
        %vm1007 = vcmp.ge.f32.partialorder %v943, 0.0
        %vm1008 = vcmp.ge.f32.partialorder %v944, 0.0
        %vm1009 = vcmp.ge.f32.partialorder %v945, 0.0
        %vm1010 = vcmp.ge.f32.partialorder %v946, 0.0
        %vm1011 = vcmp.ge.f32.partialorder %v947, 0.0
        %vm1012 = vcmp.ge.f32.partialorder %v948, 0.0
        %vm1013 = vcmp.ge.f32.partialorder %v949, 0.0
        %vm1014 = vcmp.ge.f32.partialorder %v950, 0.0
        %vm1015 = vcmp.ge.f32.partialorder %v951, 0.0
        %vm1016 = vcmp.ge.f32.partialorder %v952, 0.0
        %vm1017 = vcmp.ge.f32.partialorder %v953, 0.0
        %vm1018 = vcmp.ge.f32.partialorder %v954, 0.0
        %vm1019 = vcmp.ge.f32.partialorder %v955, 0.0
        %vm1020 = vcmp.ge.f32.partialorder %v956, 0.0
        %vm1021 = vcmp.ge.f32.partialorder %v957, 0.0
        %vm1022 = vcmp.ge.f32.partialorder %v958, 0.0
        %vm1023 = vcmp.ge.f32.partialorder %v959, 0.0
        %vm1024 = vcmp.ge.f32.partialorder %v960, 0.0
        %vm1025 = vcmp.ge.f32.partialorder %v961, 0.0
        %vm1026 = vcmp.ge.f32.partialorder %v962, 0.0
        %vm1027 = vcmp.ge.f32.partialorder %v963, 0.0
        %vm1028 = vcmp.ge.f32.partialorder %v964, 0.0
        %vm1029 = vcmp.ge.f32.partialorder %v965, 0.0
        %vm1030 = vcmp.ge.f32.partialorder %v966, 0.0
        %v1031 = vmul.f32 %v903, 0.01
        %v1032 = vmul.f32 %v904, 0.01
        %v1033 = vmul.f32 %v905, 0.01
        %v1034 = vmul.f32 %v906, 0.01
        %v1035 = vmul.f32 %v907, 0.01
        %v1036 = vmul.f32 %v908, 0.01
        %v1037 = vmul.f32 %v909, 0.01
        %v1038 = vmul.f32 %v910, 0.01
        %v1039 = vmul.f32 %v911, 0.01
        %v1040 = vmul.f32 %v912, 0.01
        %v1041 = vmul.f32 %v913, 0.01
        %v1042 = vmul.f32 %v914, 0.01
        %v1043 = vmul.f32 %v915, 0.01
        %v1044 = vmul.f32 %v916, 0.01
        %v1045 = vmul.f32 %v917, 0.01
        %v1046 = vmul.f32 %v918, 0.01
        %v1047 = vmul.f32 %v919, 0.01
        %v1048 = vmul.f32 %v920, 0.01
        %v1049 = vmul.f32 %v921, 0.01
        %v1050 = vmul.f32 %v922, 0.01
        %v1051 = vmul.f32 %v923, 0.01
        %v1052 = vmul.f32 %v924, 0.01
        %v1053 = vmul.f32 %v925, 0.01
        %v1054 = vmul.f32 %v926, 0.01
        %v1055 = vmul.f32 %v927, 0.01
        %v1056 = vmul.f32 %v928, 0.01
        %v1057 = vmul.f32 %v929, 0.01
        %v1058 = vmul.f32 %v930, 0.01
        %v1059 = vmul.f32 %v931, 0.01
        %v1060 = vmul.f32 %v932, 0.01
        %v1061 = vmul.f32 %v933, 0.01
        %v1062 = vmul.f32 %v934, 0.01
        %v1063 = vmul.f32 %v935, 0.01
        %v1064 = vmul.f32 %v936, 0.01
        %v1065 = vmul.f32 %v937, 0.01
        %v1066 = vmul.f32 %v938, 0.01
        %v1067 = vmul.f32 %v939, 0.01
        %v1068 = vmul.f32 %v940, 0.01
        %v1069 = vmul.f32 %v941, 0.01
        %v1070 = vmul.f32 %v942, 0.01
        %v1071 = vmul.f32 %v943, 0.01
        %v1072 = vmul.f32 %v944, 0.01
        %v1073 = vmul.f32 %v945, 0.01
        %v1074 = vmul.f32 %v946, 0.01
        %v1075 = vmul.f32 %v947, 0.01
        %v1076 = vmul.f32 %v948, 0.01
        %v1077 = vmul.f32 %v949, 0.01
        %v1078 = vmul.f32 %v950, 0.01
        %v1079 = vmul.f32 %v951, 0.01
        %v1080 = vmul.f32 %v952, 0.01
        %v1081 = vmul.f32 %v953, 0.01
        %v1082 = vmul.f32 %v954, 0.01
        %v1083 = vmul.f32 %v955, 0.01
        %v1084 = vmul.f32 %v956, 0.01
        %v1085 = vmul.f32 %v957, 0.01
        %v1086 = vmul.f32 %v958, 0.01
        %v1087 = vmul.f32 %v959, 0.01
        %v1088 = vmul.f32 %v960, 0.01
        %v1089 = vmul.f32 %v961, 0.01
        %v1090 = vmul.f32 %v962, 0.01
        %v1091 = vmul.f32 %v963, 0.01
        %v1092 = vmul.f32 %v964, 0.01
        %v1093 = vmul.f32 %v965, 0.01
        %v1094 = vmul.f32 %v966, 0.01
        %v1095 = vsel %vm967, %v903, %v1031
        %v1096 = vsel %vm968, %v904, %v1032
        %v1097 = vsel %vm969, %v905, %v1033
        %v1098 = vsel %vm970, %v906, %v1034
        %v1099 = vsel %vm971, %v907, %v1035
        %v1100 = vsel %vm972, %v908, %v1036
        %v1101 = vsel %vm973, %v909, %v1037
        %v1102 = vsel %vm974, %v910, %v1038
        %v1103 = vsel %vm975, %v911, %v1039
        %v1104 = vsel %vm976, %v912, %v1040
        %v1105 = vsel %vm977, %v913, %v1041
        %v1106 = vsel %vm978, %v914, %v1042
        %v1107 = vsel %vm979, %v915, %v1043
        %v1108 = vsel %vm980, %v916, %v1044
        %v1109 = vsel %vm981, %v917, %v1045
        %v1110 = vsel %vm982, %v918, %v1046
        %v1111 = vsel %vm983, %v919, %v1047
        %v1112 = vsel %vm984, %v920, %v1048
        %v1113 = vsel %vm985, %v921, %v1049
        %v1114 = vsel %vm986, %v922, %v1050
        %v1115 = vsel %vm987, %v923, %v1051
        %v1116 = vsel %vm988, %v924, %v1052
        %v1117 = vsel %vm989, %v925, %v1053
        %v1118 = vsel %vm990, %v926, %v1054
        %v1119 = vsel %vm991, %v927, %v1055
        %v1120 = vsel %vm992, %v928, %v1056
        %v1121 = vsel %vm993, %v929, %v1057
        %v1122 = vsel %vm994, %v930, %v1058
        %v1123 = vsel %vm995, %v931, %v1059
        %v1124 = vsel %vm996, %v932, %v1060
        %v1125 = vsel %vm997, %v933, %v1061
        %v1126 = vsel %vm998, %v934, %v1062
        %v1127 = vsel %vm999, %v935, %v1063
        %v1128 = vsel %vm1000, %v936, %v1064
        %v1129 = vsel %vm1001, %v937, %v1065
        %v1130 = vsel %vm1002, %v938, %v1066
        %v1131 = vsel %vm1003, %v939, %v1067
        %v1132 = vsel %vm1004, %v940, %v1068
        %v1133 = vsel %vm1005, %v941, %v1069
        %v1134 = vsel %vm1006, %v942, %v1070
        %v1135 = vsel %vm1007, %v943, %v1071
        %v1136 = vsel %vm1008, %v944, %v1072
        %v1137 = vsel %vm1009, %v945, %v1073
        %v1138 = vsel %vm1010, %v946, %v1074
        %v1139 = vsel %vm1011, %v947, %v1075
        %v1140 = vsel %vm1012, %v948, %v1076
        %v1141 = vsel %vm1013, %v949, %v1077
        %v1142 = vsel %vm1014, %v950, %v1078
        %v1143 = vsel %vm1015, %v951, %v1079
        %v1144 = vsel %vm1016, %v952, %v1080
        %v1145 = vsel %vm1017, %v953, %v1081
        %v1146 = vsel %vm1018, %v954, %v1082
        %v1147 = vsel %vm1019, %v955, %v1083
        %v1148 = vsel %vm1020, %v956, %v1084
        %v1149 = vsel %vm1021, %v957, %v1085
        %v1150 = vsel %vm1022, %v958, %v1086
        %v1151 = vsel %vm1023, %v959, %v1087
        %v1152 = vsel %vm1024, %v960, %v1088
        %v1153 = vsel %vm1025, %v961, %v1089
        %v1154 = vsel %vm1026, %v962, %v1090
        %v1155 = vsel %vm1027, %v963, %v1091
        %v1156 = vsel %vm1028, %v964, %v1092
        %v1157 = vsel %vm1029, %v965, %v1093
        %v1158 = vsel %vm1030, %v966, %v1094
        %vm1159 = vcmask 72704
        %1160 = vst.msk [vmem:[%s549] sm:$0xff] %vm1159, %v1095
        %1161 = vst.msk [vmem:[%s549 + $0x8] sm:$0xff] %vm1159, %v1096
        %1162 = vst.msk [vmem:[%s549 + $0x10] sm:$0xff] %vm1159, %v1097
        %vm1163 = vcmask 71680
        %1164 = vst.msk [vmem:[%s549 + $0x18] sm:$0x7f] %vm1163, %v1098
        %1165 = vst.msk [vmem:[%s549 + $0x20] sm:$0xff] %vm1159, %v1099
        %1166 = vst.msk [vmem:[%s549 + $0x28] sm:$0xff] %vm1159, %v1100
        %1167 = vst.msk [vmem:[%s549 + $0x30] sm:$0xff] %vm1159, %v1101
        %1168 = vst.msk [vmem:[%s549 + $0x38] sm:$0x7f] %vm1163, %v1102
        %1169 = vst.msk [vmem:[%s549 + $0x40] sm:$0xff] %vm1159, %v1103
        %1170 = vst.msk [vmem:[%s549 + $0x48] sm:$0xff] %vm1159, %v1104
        %1171 = vst.msk [vmem:[%s549 + $0x50] sm:$0xff] %vm1159, %v1105
        %1172 = vst.msk [vmem:[%s549 + $0x58] sm:$0x7f] %vm1163, %v1106
        %1173 = vst.msk [vmem:[%s549 + $0x60] sm:$0xff] %vm1159, %v1107
        %1174 = vst.msk [vmem:[%s549 + $0x68] sm:$0xff] %vm1159, %v1108
        %1175 = vst.msk [vmem:[%s549 + $0x70] sm:$0xff] %vm1159, %v1109
        %1176 = vst.msk [vmem:[%s549 + $0x78] sm:$0x7f] %vm1163, %v1110
        %1177 = vst.msk [vmem:[%s549 + $0x80] sm:$0xff] %vm1159, %v1111
        %1178 = vst.msk [vmem:[%s549 + $0x88] sm:$0xff] %vm1159, %v1112
        %1179 = vst.msk [vmem:[%s549 + $0x90] sm:$0xff] %vm1159, %v1113
        %1180 = vst.msk [vmem:[%s549 + $0x98] sm:$0x7f] %vm1163, %v1114
        %1181 = vst.msk [vmem:[%s549 + $0xa0] sm:$0xff] %vm1159, %v1115
        %1182 = vst.msk [vmem:[%s549 + $0xa8] sm:$0xff] %vm1159, %v1116
        %1183 = vst.msk [vmem:[%s549 + $0xb0] sm:$0xff] %vm1159, %v1117
        %1184 = vst.msk [vmem:[%s549 + $0xb8] sm:$0x7f] %vm1163, %v1118
        %1185 = vst.msk [vmem:[%s549 + $0xc0] sm:$0xff] %vm1159, %v1119
        %1186 = vst.msk [vmem:[%s549 + $0xc8] sm:$0xff] %vm1159, %v1120
        %1187 = vst.msk [vmem:[%s549 + $0xd0] sm:$0xff] %vm1159, %v1121
        %1188 = vst.msk [vmem:[%s549 + $0xd8] sm:$0x7f] %vm1163, %v1122
        %1189 = vst.msk [vmem:[%s549 + $0xe0] sm:$0xff] %vm1159, %v1123
        %1190 = vst.msk [vmem:[%s549 + $0xe8] sm:$0xff] %vm1159, %v1124
        %1191 = vst.msk [vmem:[%s549 + $0xf0] sm:$0xff] %vm1159, %v1125
        %1192 = vst.msk [vmem:[%s549 + $0xf8] sm:$0x7f] %vm1163, %v1126
        %1193 = vst.msk [vmem:[%s549 + $0x100] sm:$0xff] %vm1159, %v1127
        %1194 = vst.msk [vmem:[%s549 + $0x108] sm:$0xff] %vm1159, %v1128
        %1195 = vst.msk [vmem:[%s549 + $0x110] sm:$0xff] %vm1159, %v1129
        %1196 = vst.msk [vmem:[%s549 + $0x118] sm:$0x7f] %vm1163, %v1130
        %1197 = vst.msk [vmem:[%s549 + $0x120] sm:$0xff] %vm1159, %v1131
        %1198 = vst.msk [vmem:[%s549 + $0x128] sm:$0xff] %vm1159, %v1132
        %1199 = vst.msk [vmem:[%s549 + $0x130] sm:$0xff] %vm1159, %v1133
        %1200 = vst.msk [vmem:[%s549 + $0x138] sm:$0x7f] %vm1163, %v1134
        %1201 = vst.msk [vmem:[%s549 + $0x140] sm:$0xff] %vm1159, %v1135
        %1202 = vst.msk [vmem:[%s549 + $0x148] sm:$0xff] %vm1159, %v1136
        %1203 = vst.msk [vmem:[%s549 + $0x150] sm:$0xff] %vm1159, %v1137
        %1204 = vst.msk [vmem:[%s549 + $0x158] sm:$0x7f] %vm1163, %v1138
        %1205 = vst.msk [vmem:[%s549 + $0x160] sm:$0xff] %vm1159, %v1139
        %1206 = vst.msk [vmem:[%s549 + $0x168] sm:$0xff] %vm1159, %v1140
        %1207 = vst.msk [vmem:[%s549 + $0x170] sm:$0xff] %vm1159, %v1141
        %1208 = vst.msk [vmem:[%s549 + $0x178] sm:$0x7f] %vm1163, %v1142
        %1209 = vst.msk [vmem:[%s549 + $0x180] sm:$0xff] %vm1159, %v1143
        %1210 = vst.msk [vmem:[%s549 + $0x188] sm:$0xff] %vm1159, %v1144
        %1211 = vst.msk [vmem:[%s549 + $0x190] sm:$0xff] %vm1159, %v1145
        %1212 = vst.msk [vmem:[%s549 + $0x198] sm:$0x7f] %vm1163, %v1146
        %1213 = vst.msk [vmem:[%s549 + $0x1a0] sm:$0xff] %vm1159, %v1147
        %1214 = vst.msk [vmem:[%s549 + $0x1a8] sm:$0xff] %vm1159, %v1148
        %1215 = vst.msk [vmem:[%s549 + $0x1b0] sm:$0xff] %vm1159, %v1149
        %1216 = vst.msk [vmem:[%s549 + $0x1b8] sm:$0x7f] %vm1163, %v1150
        %1217 = vst.msk [vmem:[%s549 + $0x1c0] sm:$0xff] %vm1159, %v1151
        %1218 = vst.msk [vmem:[%s549 + $0x1c8] sm:$0xff] %vm1159, %v1152
        %1219 = vst.msk [vmem:[%s549 + $0x1d0] sm:$0xff] %vm1159, %v1153
        %1220 = vst.msk [vmem:[%s549 + $0x1d8] sm:$0x7f] %vm1163, %v1154
        %1221 = vst.msk [vmem:[%s549 + $0x1e0] sm:$0xff] %vm1159, %v1155
        %1222 = vst.msk [vmem:[%s549 + $0x1e8] sm:$0xff] %vm1159, %v1156
        %1223 = vst.msk [vmem:[%s549 + $0x1f0] sm:$0xff] %vm1159, %v1157
        %1224 = vst.msk [vmem:[%s549 + $0x1f8] sm:$0x7f] %vm1163, %v1158
        %s1225 = smul.u32 4, %s19
        %p1226 = scmp.lt.s32.totalorder %s18, 1
        %s1227 = scalar_select %p1226, %s18, 1
        %p1228 = scmp.lt.s32.totalorder %s1225, 3
        %s1229 = scalar_select %p1228, %s1225, 3
        %s1230 = smul.addr %s1227, 64
        %s1231 = sadd.s32 %s1229, %s1230
        %s1232 = smul.addr %s1231, 8
        %s1233 = scalar_lea.vmem %s3, %s1232
        // Predicated region
        $region71: #{decoder_forward.3} parent=65 // pred_check
          %p1234 = pneg %p116
        $region72: #{decoder_forward.3} parent=65 // pred_check_branch
          %1236 = sbr.rel (%p1234) target = $region74
        $region73: #{decoder_forward.3} parent=65 // pred_region
          %s1237 = smul.u32 4, %s19
        $region74: #{decoder_forward.3} parent=65 // pred_fallthru
          _
      $region66: #{decoder_forward.3} parent=5 // pred_fallthru
        _
      %p1238 = scmp.le.s32.totalorder 2, %s9
      // Predicated region
      $region75: #{decoder_forward.3} parent=5 // pred_check
        %p1239 = pneg %p1238
      $region76: #{decoder_forward.3} parent=5 // pred_check_branch
        %1241 = sbr.rel (%p1239) target = $region78
      $region77: #{decoder_forward.3} parent=5 // pred_region
        %s1242 = ssub.s32 %s9, 2
        // Predicated region
        $region79: #{decoder_forward.3} parent=77 // pred_check
          %p1243 = pneg %p122
        $region80: #{decoder_forward.3} parent=77 // pred_check_branch
          %1245 = sbr.rel (%p1243) target = $region82
        $region81: #{decoder_forward.3} parent=77 // pred_region
          %s1246 = smul.u32 4, %s21
          %p1247 = scmp.lt.s32.totalorder %s20, 1
          %s1248 = scalar_select %p1247, %s20, 1
          %p1249 = scmp.lt.s32.totalorder %s1246, 3
          %s1250 = scalar_select %p1249, %s1246, 3
          %s1251 = smul.addr %s1248, 64
          %s1252 = sadd.s32 %s1250, %s1251
          %s1253 = smul.addr %s1252, 8
          %s1254 = scalar_lea.vmem %s3, %s1253
        $region82: #{decoder_forward.3} parent=77 // pred_fallthru
          _
      $region78: #{decoder_forward.3} parent=5 // pred_fallthru
        _
    $region6: #{decoder_forward.3} parent=1 // loop_footer
      %s13 = sadd.s32 1, %s9
    $region7: #{decoder_forward.3} parent=1 // loop_footer_branch
      %8 = sbr.rel target = $region3
    $region8: #{decoder_forward.3} parent=1 // loop_exit
      _

// kernel: decoder_forward.2
$region0: #{decoder_forward.2}
  #allocation0 [shape = 'u32[]', space=smem, size = 0x4, offset = 0x4, fixed_abs, tag = 'smem constant byte address 0x4 - core index']
  #allocation1 [shape = 'u32[72,128]{1,0:T(1,128)}', space=vmem, size = 0x9000, scoped, tag = 'internal scratch']
  #allocation2 [shape = 'f32[8,512]{1,0:T(8,128)}', space=vmem, size = 0x4000, scoped, tag = 'scratch operand']
  #allocation3 [shape = 'f32[48,384]{1,0:T(8,128)}', space=vmem, size = 0x12000, scoped, tag = 'scratch operand']
  %s0 = inlined_call_operand.vmem [shape: f32[8,1152], index: 0, kind: input, shape index: {}]
  %s1 = inlined_call_operand.vmem [shape: f32[2,8,128], index: 1, kind: input, shape index: {}]
  %s2 = inlined_call_operand.vmem [shape: f32[16,48], index: 2, kind: input, shape index: {}]
  %s3 = inlined_call_operand.vmem [shape: f32[16,1], index: 3, kind: input, shape index: {}]
  %s4 = inlined_call_operand.vmem [shape: f32[1,768], index: 4, kind: input, shape index: {}]
  %s5 = inlined_call_operand.vmem [shape: f32[16,660], index: 5, kind: output, shape index: {0}]
  %s6 = inlined_call_operand.vmem [shape: f32[2,16,1], index: 6, kind: output, shape index: {1}]
  %s7 = inlined_call_operand.vmem [shape: f32[2,16,1], index: 7, kind: output, shape index: {2}]
  %8 = xla_tuple %s5, %s6, %s7
  %s9 = sld [smem:[#allocation0]]
  $region88: #{decoder_forward.2} parent=0
    _
  %s11 = ssub.s32 1, %s9
  %s12 = scalar_select 0, %s11, %s9
  $region1: #{decoder_forward.2} parent=0
    #allocation4 [shape = 'u8[49152]{0}', space=vmem, size = 0xc000, scoped, tag = 'output window, operand 0']
    loop: start=0, step=1, limit=4
    $region2: #{decoder_forward.2} parent=1 // loop_pre_header
      _
    $region3: #{decoder_forward.2} parent=1 // loop_header
      %s14 = sphi 0, %s18
      %p15 = scmp.ge.s32.totalorder %s14, 4
      %s24 = sphi 0, %s26
      %s27 = sphi 0, %s24
      %s28 = sphi 0, %s27
      %s44 = sphi 0, %s28
      %s50 = sphi 0, %s52
      %s53 = sphi 0, %s50
      %s54 = sphi 0, %s53
      %s70 = sphi 0, %s54
      %s74 = sphi 0, %s74
      %s76 = sphi 0, %s74
      %s77 = sphi 0, %s76
      %s91 = sphi 0, %s77
      %s95 = sphi 0, %s95
      %s97 = sphi 0, %s95
      %s98 = sphi 0, %s97
      %s112 = sphi 0, %s98
      %s118 = sphi 0, %s120
      %s121 = sphi 0, %s118
      %s122 = sphi 0, %s121
      %s138 = sphi 0, %s122
      %s144 = sphi 0, %s146
      %s147 = sphi 0, %s144
      %s148 = sphi 0, %s147
      %s164 = sphi 0, %s148
      %s170 = sphi 0, %s172
      %s173 = sphi 0, %s170
      %s174 = sphi 0, %s173
      %s190 = sphi 0, %s174
      %s196 = sphi 0, %s198
      %s199 = sphi 0, %s196
      %s200 = sphi 0, %s199
      %s216 = sphi 0, %s200
    $region4: #{decoder_forward.2} parent=1 // loop_header_branch
      %17 = sbr.rel (%p15) target = $region8
    $region5: #{decoder_forward.2} parent=1 // loop_body
      %s19 = ssub.s32 %s14, 1
      %s20 = ssub.s32 %s14, 2
      %s21 = sadd.s32 %s14, 1
      %s22 = ssub.s32 %s14, %s21
      %p23 = scmp.eq.s32.totalorder %s22, 0
      %s25 = sadd.s32 %s24, 1
      %s26 = scalar_select %p23, %s24, %s25
      %p29 = pneg %p23
      %p30 = scmp.eq.s32.totalorder %s14, 1
      %p31 = por %p29, %p30
      %p32 = scmp.ne.s32.totalorder %s24, %s27
      %p33 = scmp.eq.s32.totalorder %s14, 0
      %p34 = por %p32, %p33
      %p35 = scmp.ne.s32.totalorder %s24, %s27
      %p36 = scmp.eq.s32.totalorder %s19, 1
      %p37 = por %p35, %p36
      %p38 = scmp.ne.s32.totalorder %s27, %s28
      %p39 = scmp.eq.s32.totalorder %s19, 0
      %p40 = por %p38, %p39
      %p41 = scmp.ne.s32.totalorder %s27, %s28
      %p42 = scmp.eq.s32.totalorder %s20, 1
      %p43 = por %p41, %p42
      %p45 = scmp.ne.s32.totalorder %s28, %s44
      %p46 = scmp.eq.s32.totalorder %s20, 0
      %p47 = por %p45, %p46
      %s48 = ssub.s32 %s14, %s21
      %p49 = scmp.eq.s32.totalorder %s48, 0
      %s51 = sadd.s32 %s50, 1
      %s52 = scalar_select %p49, %s50, %s51
      %p55 = pneg %p49
      %p56 = scmp.eq.s32.totalorder %s14, 1
      %p57 = por %p55, %p56
      %p58 = scmp.ne.s32.totalorder %s50, %s53
      %p59 = scmp.eq.s32.totalorder %s14, 0
      %p60 = por %p58, %p59
      %p61 = scmp.ne.s32.totalorder %s50, %s53
      %p62 = scmp.eq.s32.totalorder %s19, 1
      %p63 = por %p61, %p62
      %p64 = scmp.ne.s32.totalorder %s53, %s54
      %p65 = scmp.eq.s32.totalorder %s19, 0
      %p66 = por %p64, %p65
      %p67 = scmp.ne.s32.totalorder %s53, %s54
      %p68 = scmp.eq.s32.totalorder %s20, 1
      %p69 = por %p67, %p68
      %p71 = scmp.ne.s32.totalorder %s54, %s70
      %p72 = scmp.eq.s32.totalorder %s20, 0
      %p73 = por %p71, %p72
      %s75 = sadd.s32 %s74, 1
      %p78 = scmp.eq.s32.totalorder %s14, 1
      %p79 = scmp.ne.s32.totalorder %s74, %s76
      %p80 = scmp.eq.s32.totalorder %s14, 0
      %p81 = por %p79, %p80
      %p82 = scmp.ne.s32.totalorder %s74, %s76
      %p83 = scmp.eq.s32.totalorder %s19, 1
      %p84 = por %p82, %p83
      %p85 = scmp.ne.s32.totalorder %s76, %s77
      %p86 = scmp.eq.s32.totalorder %s19, 0
      %p87 = por %p85, %p86
      %p88 = scmp.ne.s32.totalorder %s76, %s77
      %p89 = scmp.eq.s32.totalorder %s20, 1
      %p90 = por %p88, %p89
      %p92 = scmp.ne.s32.totalorder %s77, %s91
      %p93 = scmp.eq.s32.totalorder %s20, 0
      %p94 = por %p92, %p93
      %s96 = sadd.s32 %s95, 1
      %p99 = scmp.eq.s32.totalorder %s14, 1
      %p100 = scmp.ne.s32.totalorder %s95, %s97
      %p101 = scmp.eq.s32.totalorder %s14, 0
      %p102 = por %p100, %p101
      %p103 = scmp.ne.s32.totalorder %s95, %s97
      %p104 = scmp.eq.s32.totalorder %s19, 1
      %p105 = por %p103, %p104
      %p106 = scmp.ne.s32.totalorder %s97, %s98
      %p107 = scmp.eq.s32.totalorder %s19, 0
      %p108 = por %p106, %p107
      %p109 = scmp.ne.s32.totalorder %s97, %s98
      %p110 = scmp.eq.s32.totalorder %s20, 1
      %p111 = por %p109, %p110
      %p113 = scmp.ne.s32.totalorder %s98, %s112
      %p114 = scmp.eq.s32.totalorder %s20, 0
      %p115 = por %p113, %p114
      %s116 = ssub.s32 %s14, %s21
      %p117 = scmp.eq.s32.totalorder %s116, 0
      %s119 = sadd.s32 %s118, 1
      %s120 = scalar_select %p117, %s118, %s119
      %p123 = pneg %p117
      %p124 = scmp.eq.s32.totalorder %s14, 1
      %p125 = por %p123, %p124
      %p126 = scmp.ne.s32.totalorder %s118, %s121
      %p127 = scmp.eq.s32.totalorder %s14, 0
      %p128 = por %p126, %p127
      %p129 = scmp.ne.s32.totalorder %s118, %s121
      %p130 = scmp.eq.s32.totalorder %s19, 1
      %p131 = por %p129, %p130
      %p132 = scmp.ne.s32.totalorder %s121, %s122
      %p133 = scmp.eq.s32.totalorder %s19, 0
      %p134 = por %p132, %p133
      %p135 = scmp.ne.s32.totalorder %s121, %s122
      %p136 = scmp.eq.s32.totalorder %s20, 1
      %p137 = por %p135, %p136
      %p139 = scmp.ne.s32.totalorder %s122, %s138
      %p140 = scmp.eq.s32.totalorder %s20, 0
      %p141 = por %p139, %p140
      %s142 = ssub.s32 %s14, %s21
      %p143 = scmp.eq.s32.totalorder %s142, 0
      %s145 = sadd.s32 %s144, 1
      %s146 = scalar_select %p143, %s144, %s145
      %p149 = pneg %p143
      %p150 = scmp.eq.s32.totalorder %s14, 1
      %p151 = por %p149, %p150
      %p152 = scmp.ne.s32.totalorder %s144, %s147
      %p153 = scmp.eq.s32.totalorder %s14, 0
      %p154 = por %p152, %p153
      %p155 = scmp.ne.s32.totalorder %s144, %s147
      %p156 = scmp.eq.s32.totalorder %s19, 1
      %p157 = por %p155, %p156
      %p158 = scmp.ne.s32.totalorder %s147, %s148
      %p159 = scmp.eq.s32.totalorder %s19, 0
      %p160 = por %p158, %p159
      %p161 = scmp.ne.s32.totalorder %s147, %s148
      %p162 = scmp.eq.s32.totalorder %s20, 1
      %p163 = por %p161, %p162
      %p165 = scmp.ne.s32.totalorder %s148, %s164
      %p166 = scmp.eq.s32.totalorder %s20, 0
      %p167 = por %p165, %p166
      %s168 = ssub.s32 %s14, %s21
      %p169 = scmp.eq.s32.totalorder %s168, 0
      %s171 = sadd.s32 %s170, 1
      %s172 = scalar_select %p169, %s170, %s171
      %p175 = pneg %p169
      %p176 = scmp.eq.s32.totalorder %s14, 1
      %p177 = por %p175, %p176
      %p178 = scmp.ne.s32.totalorder %s170, %s173
      %p179 = scmp.eq.s32.totalorder %s14, 0
      %p180 = por %p178, %p179
      %p181 = scmp.ne.s32.totalorder %s170, %s173
      %p182 = scmp.eq.s32.totalorder %s19, 1
      %p183 = por %p181, %p182
      %p184 = scmp.ne.s32.totalorder %s173, %s174
      %p185 = scmp.eq.s32.totalorder %s19, 0
      %p186 = por %p184, %p185
      %p187 = scmp.ne.s32.totalorder %s173, %s174
      %p188 = scmp.eq.s32.totalorder %s20, 1
      %p189 = por %p187, %p188
      %p191 = scmp.ne.s32.totalorder %s174, %s190
      %p192 = scmp.eq.s32.totalorder %s20, 0
      %p193 = por %p191, %p192
      %s194 = ssub.s32 %s14, %s21
      %p195 = scmp.eq.s32.totalorder %s194, 0
      %s197 = sadd.s32 %s196, 1
      %s198 = scalar_select %p195, %s196, %s197
      %p201 = pneg %p195
      %p202 = scmp.eq.s32.totalorder %s14, 1
      %p203 = por %p201, %p202
      %p204 = scmp.ne.s32.totalorder %s196, %s199
      %p205 = scmp.eq.s32.totalorder %s14, 0
      %p206 = por %p204, %p205
      %p207 = scmp.ne.s32.totalorder %s196, %s199
      %p208 = scmp.eq.s32.totalorder %s19, 1
      %p209 = por %p207, %p208
      %p210 = scmp.ne.s32.totalorder %s199, %s200
      %p211 = scmp.eq.s32.totalorder %s19, 0
      %p212 = por %p210, %p211
      %p213 = scmp.ne.s32.totalorder %s199, %s200
      %p214 = scmp.eq.s32.totalorder %s20, 1
      %p215 = por %p213, %p214
      %p217 = scmp.ne.s32.totalorder %s200, %s216
      %p218 = scmp.eq.s32.totalorder %s20, 0
      %p219 = por %p217, %p218
      %p220 = scmp.le.s32.totalorder 1, %s14
      %p221 = scmp.lt.s32.totalorder %s14, 3
      %p222 = pnand %p220, %p221
      %p223 = pneg %p222
      // Predicated region
      $region9: #{decoder_forward.2} parent=5 // pred_check
        _
      $region10: #{decoder_forward.2} parent=5 // pred_check_branch
        %225 = sbr.rel (%p222) target = $region12
      $region11: #{decoder_forward.2} parent=5 // pred_region
        %s226 = ssub.s32 %s14, 1
        // Predicated region
        $region13: #{decoder_forward.2} parent=11 // pred_check
          %p227 = pneg %p87
        $region14: #{decoder_forward.2} parent=11 // pred_check_branch
          %229 = sbr.rel (%p227) target = $region16
        $region15: #{decoder_forward.2} parent=11 // pred_region
          _
        $region16: #{decoder_forward.2} parent=11 // pred_fallthru
          _
        // Predicated region
        $region17: #{decoder_forward.2} parent=11 // pred_check
          %p230 = pneg %p108
        $region18: #{decoder_forward.2} parent=11 // pred_check_branch
          %232 = sbr.rel (%p230) target = $region20
        $region19: #{decoder_forward.2} parent=11 // pred_region
          _
        $region20: #{decoder_forward.2} parent=11 // pred_fallthru
          _
      $region12: #{decoder_forward.2} parent=5 // pred_fallthru
        _
      %p233 = scmp.lt.s32.totalorder %s14, 2
      // Predicated region
      $region21: #{decoder_forward.2} parent=5 // pred_check
        %p234 = pneg %p233
      $region22: #{decoder_forward.2} parent=5 // pred_check_branch
        %236 = sbr.rel (%p234) target = $region24
      $region23: #{decoder_forward.2} parent=5 // pred_region
        // Predicated region
        $region25: #{decoder_forward.2} parent=23 // pred_check
          %p237 = pneg %p34
        $region26: #{decoder_forward.2} parent=23 // pred_check_branch
          %239 = sbr.rel (%p237) target = $region28
        $region27: #{decoder_forward.2} parent=23 // pred_region
          %s240 = smul.u32 3, %s14
          %p241 = scmp.lt.s32.totalorder %s240, 8
          %s242 = scalar_select %p241, %s240, 8
          %s243 = smul.addr %s242, 8
          %s244 = scalar_lea.vmem %s0, %s243
          %s245 = smul.u32 3, %s14
        $region28: #{decoder_forward.2} parent=23 // pred_fallthru
          _
        // Predicated region
        $region29: #{decoder_forward.2} parent=23 // pred_check
          %p246 = pneg %p60
        $region30: #{decoder_forward.2} parent=23 // pred_check_branch
          %248 = sbr.rel (%p246) target = $region32
        $region31: #{decoder_forward.2} parent=23 // pred_region
          %p249 = scmp.lt.s32.totalorder %s14, 1
          %s250 = scalar_select %p249, %s14, 1
          %s251 = smul.addr %s250, 8
          %s252 = scalar_lea.vmem %s1, %s251
        $region32: #{decoder_forward.2} parent=23 // pred_fallthru
          _
        // Predicated region
        $region33: #{decoder_forward.2} parent=23 // pred_check
          %p253 = pneg %p128
        $region34: #{decoder_forward.2} parent=23 // pred_check_branch
          %255 = sbr.rel (%p253) target = $region36
        $region35: #{decoder_forward.2} parent=23 // pred_region
          %s256 = smul.u32 3, %s14
          %p257 = scmp.lt.s32.totalorder %s256, 5
          %s258 = scalar_select %p257, %s256, 5
          %s259 = scalar_lea.vmem %s4, %s258
          %s260 = smul.u32 3, %s14
        $region36: #{decoder_forward.2} parent=23 // pred_fallthru
          _
      $region24: #{decoder_forward.2} parent=5 // pred_fallthru
        _
      %p261 = scmp.le.s32.totalorder 1, %s14
      %p262 = scmp.lt.s32.totalorder %s14, 3
      %p263 = pnand %p261, %p262
      %p264 = pneg %p263
      // Predicated region
      $region37: #{decoder_forward.2} parent=5 // pred_check
        _
      $region38: #{decoder_forward.2} parent=5 // pred_check_branch
        %266 = sbr.rel (%p263) target = $region40
      $region39: #{decoder_forward.2} parent=5 // pred_region
        %s267 = ssub.s32 %s14, 1
        %s268 = smul.u32 3, %s19
        %p269 = scmp.lt.s32.totalorder %s268, 8
        %s270 = scalar_select %p269, %s268, 8
        %s271 = smul.addr %s270, 8
        %s272 = scalar_lea.vmem %s0, %s271
        %p273 = pneg %p40
        %p274 = pneg %p37
        %p275 = scmp.lt.s32.totalorder %s19, 1
        %s276 = scalar_select %p275, %s19, 1
        %s277 = smul.addr %s276, 8
        %s278 = scalar_lea.vmem %s1, %s277
        %p279 = pneg %p66
        %p280 = pneg %p63
        %p281 = pneg %p87
        %p282 = pneg %p84
        %p283 = pneg %p108
        %p284 = pneg %p105
        %s285 = smul.u32 3, %s19
        %p286 = scmp.lt.s32.totalorder %s285, 5
        %s287 = scalar_select %p286, %s285, 5
        %s288 = scalar_lea.vmem %s4, %s287
        %p289 = pneg %p134
        %p290 = pneg %p131
        %p291 = pneg %p160
        %p292 = pneg %p157
        %s293 = sand.u32 %s147, 1
        %s294 = sand.u32 %s147, 1
        %s295 = smul.addr %s294, 48
        %s296 = scalar_lea.vmem [#allocation4], %s295
        %p297 = pneg %p186
        %p298 = pneg %p183
        %p299 = scmp.lt.s32.totalorder %s19, 1
        %s300 = scalar_select %p299, %s19, 1
        %s301 = smul.addr %s300, 2
        %s302 = smul.addr %s301, 8
        %s303 = scalar_lea.vmem %s6, %s302
        %p304 = pneg %p212
        %p305 = pneg %p209
        %p306 = scmp.lt.s32.totalorder %s19, 1
        %s307 = scalar_select %p306, %s19, 1
        %s308 = smul.addr %s307, 2
        %s309 = smul.addr %s308, 8
        %s310 = scalar_lea.vmem %s7, %s309
        %s311 = smul.u32 3, %s19
        %p312 = scmp.lt.s32.totalorder %s311, 8
        %s313 = scalar_select %p312, %s311, 8
        %s314 = smul.addr %s313, 8
        %s315 = scalar_lea.vmem %s0, %s314
        %s316 = smul.u32 3, %s19
        %p317 = scmp.lt.s32.totalorder %s19, 1
        %s318 = scalar_select %p317, %s19, 1
        %s319 = smul.addr %s318, 8
        %s320 = scalar_lea.vmem %s1, %s319
        %s321 = smul.u32 3, %s19
        %p322 = scmp.lt.s32.totalorder %s321, 5
        %s323 = scalar_select %p322, %s321, 5
        %s324 = scalar_lea.vmem %s4, %s323
        %s325 = smul.u32 3, %s19
        %s326 = smul.u32 3, %s19
        %p327 = scmp.lt.s32.totalorder %s19, 1
        %s328 = scalar_select %p327, %s19, 1
        %s329 = smul.addr %s328, 2
        %s330 = smul.addr %s329, 8
        %s331 = scalar_lea.vmem %s6, %s330
        %p332 = scmp.lt.s32.totalorder %s19, 1
        %s333 = scalar_select %p332, %s19, 1
        %s334 = smul.addr %s333, 2
        %s335 = smul.addr %s334, 8
        %s336 = scalar_lea.vmem %s7, %s335
        %v337 = vld [vmem:[%s315] sm:$0xff]
        %v338 = vld [vmem:[%s315 + $0x8] sm:$0xff]
        %v339 = vld [vmem:[%s315 + $0x10] sm:$0xff]
        %340 = vst [vmem:[#allocation2] sm:$0xff] %v337
        %341 = vst [vmem:[#allocation2 + $0x8] sm:$0xff] %v338
        %342 = vst [vmem:[#allocation2 + $0x10] sm:$0xff] %v339
        %v343 = vld [vmem:[%s320] sm:$0xff]
        %344 = vst [vmem:[#allocation2 + $0x18] sm:$0xff] %v343
        %v345 = vld [vmem:[#allocation2] sm:$0xff]
        %v346 = vld [vmem:[#allocation2 + $0x8] sm:$0xff]
        %v347 = vld [vmem:[#allocation2 + $0x10] sm:$0xff]
        %348 = vst [vmem:[#allocation3] sm:$0xff] %v345
        %349 = vst [vmem:[#allocation3 + $0x8] sm:$0xff] %v346
        %350 = vst [vmem:[#allocation3 + $0x10] sm:$0xff] %v347
        %v351 = vld [vmem:[#allocation2] sm:$0xff]
        %v352 = vld [vmem:[#allocation2 + $0x8] sm:$0xff]
        %v353 = vld [vmem:[#allocation2 + $0x10] sm:$0xff]
        %v354 = vld [vmem:[#allocation2 + $0x18] sm:$0xff]
        %359 = vrot.lane.b32.xlu0 %v351, 127
        %v360 = vpop.permute.xlu0 %359
        %361 = vrot.lane.b32.xlu0 %v352, 127
        %v362 = vpop.permute.xlu0 %361
        %363 = vrot.lane.b32.xlu0 %v353, 127
        %v364 = vpop.permute.xlu0 %363
        %365 = vrot.lane.b32.xlu0 %v354, 127
        %v366 = vpop.permute.xlu0 %365
        %vm367 = vcmask 1039360
        %v368 = vsel %vm367, %v360, %v362
        %v369 = vsel %vm367, %v362, %v364
        %v370 = vsel %vm367, %v364, %v366
        %374 = vst [vmem:[#allocation3 + $0x18] sm:$0xff] %v368
        %375 = vst [vmem:[#allocation3 + $0x20] sm:$0xff] %v369
        %376 = vst [vmem:[#allocation3 + $0x28] sm:$0xff] %v370
        %v377 = vld [vmem:[#allocation2] sm:$0xff]
        %v378 = vld [vmem:[#allocation2 + $0x8] sm:$0xff]
        %v379 = vld [vmem:[#allocation2 + $0x10] sm:$0xff]
        %v380 = vld [vmem:[#allocation2 + $0x18] sm:$0xff]
        %385 = vrot.lane.b32.xlu0 %v377, 118
        %v386 = vpop.permute.xlu0 %385
        %387 = vrot.lane.b32.xlu0 %v378, 118
        %v388 = vpop.permute.xlu0 %387
        %389 = vrot.lane.b32.xlu0 %v379, 118
        %v390 = vpop.permute.xlu0 %389
        %391 = vrot.lane.b32.xlu0 %v380, 118
        %v392 = vpop.permute.xlu0 %391
        %vm393 = vcmask 965632
        %v394 = vsel %vm393, %v386, %v388
        %v395 = vsel %vm393, %v388, %v390
        %v396 = vsel %vm393, %v390, %v392
        %400 = vst [vmem:[#allocation3 + $0x30] sm:$0xff] %v394
        %401 = vst [vmem:[#allocation3 + $0x38] sm:$0xff] %v395
        %402 = vst [vmem:[#allocation3 + $0x40] sm:$0xff] %v396
        %v403 = vld [vmem:[#allocation2] sm:$0xff]
        %v404 = vld [vmem:[#allocation2 + $0x8] sm:$0xff]
        %v405 = vld [vmem:[#allocation2 + $0x10] sm:$0xff]
        %v406 = vld [vmem:[#allocation2 + $0x18] sm:$0xff]
        %411 = vrot.lane.b32.xlu0 %v403, 117
        %v412 = vpop.permute.xlu0 %411
        %413 = vrot.lane.b32.xlu0 %v404, 117
        %v414 = vpop.permute.xlu0 %413
        %415 = vrot.lane.b32.xlu0 %v405, 117
        %v416 = vpop.permute.xlu0 %415
        %417 = vrot.lane.b32.xlu0 %v406, 117
        %v418 = vpop.permute.xlu0 %417
        %vm419 = vcmask 957440
        %v420 = vsel %vm419, %v412, %v414
        %v421 = vsel %vm419, %v414, %v416
        %v422 = vsel %vm419, %v416, %v418
        %426 = vst [vmem:[#allocation3 + $0x48] sm:$0xff] %v420
        %427 = vst [vmem:[#allocation3 + $0x50] sm:$0xff] %v421
        %428 = vst [vmem:[#allocation3 + $0x58] sm:$0xff] %v422
        %v429 = vld [vmem:[#allocation2] sm:$0xff]
        %v430 = vld [vmem:[#allocation2 + $0x8] sm:$0xff]
        %v431 = vld [vmem:[#allocation2 + $0x10] sm:$0xff]
        %v432 = vld [vmem:[#allocation2 + $0x18] sm:$0xff]
        %437 = vrot.lane.b32.xlu0 %v429, 108
        %v438 = vpop.permute.xlu0 %437
        %439 = vrot.lane.b32.xlu0 %v430, 108
        %v440 = vpop.permute.xlu0 %439
        %441 = vrot.lane.b32.xlu0 %v431, 108
        %v442 = vpop.permute.xlu0 %441
        %443 = vrot.lane.b32.xlu0 %v432, 108
        %v444 = vpop.permute.xlu0 %443
        %vm445 = vcmask 883712
        %v446 = vsel %vm445, %v438, %v440
        %v447 = vsel %vm445, %v440, %v442
        %v448 = vsel %vm445, %v442, %v444
        %452 = vst [vmem:[#allocation3 + $0x60] sm:$0xff] %v446
        %453 = vst [vmem:[#allocation3 + $0x68] sm:$0xff] %v447
        %454 = vst [vmem:[#allocation3 + $0x70] sm:$0xff] %v448
        %v455 = vld [vmem:[#allocation2] sm:$0xff]
        %v456 = vld [vmem:[#allocation2 + $0x8] sm:$0xff]
        %v457 = vld [vmem:[#allocation2 + $0x10] sm:$0xff]
        %v458 = vld [vmem:[#allocation2 + $0x18] sm:$0xff]
        %463 = vrot.lane.b32.xlu0 %v455, 107
        %v464 = vpop.permute.xlu0 %463
        %465 = vrot.lane.b32.xlu0 %v456, 107
        %v466 = vpop.permute.xlu0 %465
        %467 = vrot.lane.b32.xlu0 %v457, 107
        %v468 = vpop.permute.xlu0 %467
        %469 = vrot.lane.b32.xlu0 %v458, 107
        %v470 = vpop.permute.xlu0 %469
        %vm471 = vcmask 875520
        %v472 = vsel %vm471, %v464, %v466
        %v473 = vsel %vm471, %v466, %v468
        %v474 = vsel %vm471, %v468, %v470
        %478 = vst [vmem:[#allocation3 + $0x78] sm:$0xff] %v472
        %479 = vst [vmem:[#allocation3 + $0x80] sm:$0xff] %v473
        %480 = vst [vmem:[#allocation3 + $0x88] sm:$0xff] %v474
        %v481 = vld [vmem:[%s2] sm:$0xff]
        %v482 = vld [vmem:[%s2 + $0x8] sm:$0xff]
        %v483 = vld [vmem:[#allocation3] sm:$0xff]
        %v484 = vld [vmem:[#allocation3 + $0x8] sm:$0xff]
        %v485 = vld [vmem:[#allocation3 + $0x10] sm:$0xff]
        %v486 = vld [vmem:[#allocation3 + $0x18] sm:$0xff]
        %v487 = vld [vmem:[#allocation3 + $0x20] sm:$0xff]
        %v488 = vld [vmem:[#allocation3 + $0x28] sm:$0xff]
        %v489 = vld [vmem:[#allocation3 + $0x30] sm:$0xff]
        %v490 = vld [vmem:[#allocation3 + $0x38] sm:$0xff]
        %v491 = vld [vmem:[#allocation3 + $0x40] sm:$0xff]
        %v492 = vld [vmem:[#allocation3 + $0x48] sm:$0xff]
        %v493 = vld [vmem:[#allocation3 + $0x50] sm:$0xff]
        %v494 = vld [vmem:[#allocation3 + $0x58] sm:$0xff]
        %v495 = vld [vmem:[#allocation3 + $0x60] sm:$0xff]
        %v496 = vld [vmem:[#allocation3 + $0x68] sm:$0xff]
        %v497 = vld [vmem:[#allocation3 + $0x70] sm:$0xff]
        %v498 = vld [vmem:[#allocation3 + $0x78] sm:$0xff]
        %v499 = vld [vmem:[#allocation3 + $0x80] sm:$0xff]
        %v500 = vld [vmem:[#allocation3 + $0x88] sm:$0xff]
        %v501 = vld [vmem:[%s3] sm:$0xff]
        %v502 = vld [vmem:[%s3 + $0x8] sm:$0xff]
        %504 = vset.pattern.permute.xlu0 0
        %505 = vperm.xlu0 %504, %v501
        %v506 = vpop.permute.xlu0 %505
        %509 = vset.pattern.permute.xlu0 0
        %510 = vperm.xlu0 %509, %v502
        %v511 = vpop.permute.xlu0 %510
        %vm513 = vcmask 392192
        %v515 = vsel %vm513, %v481, 0
        %v518 = vsel %vm513, %v482, 0
        %520 = vmatpush.msra.mxu0 0.0
        %521 = vmatpush.msra.mxu0 0.0
        %522 = vmatpush.msra.mxu0 0.0
        %523 = vmatpush.msra.mxu0 0.0
        %524 = vmatpush.msra.mxu0 0.0
        %525 = vmatpush.msra.mxu0 0.0
        %526 = vmatpush.msra.mxu0 0.0
        %527 = vmatpush.msra.mxu0 0.0
        %528 = vmatpush.msra.mxu0 0.0
        %529 = vmatpush.msra.mxu0 0.0
        %530 = vmatpush.msra.mxu0 %v498
        %531 = vmatpush.msra.mxu0 %v495
        %532 = vmatpush.msra.mxu0 %v492
        %533 = vmatpush.msra.mxu0 %v489
        %534 = vmatpush.msra.mxu0 %v486
        %535 = vmatpush.msra.mxu0 %v483
        %536 = vmatmul.f32.gmra.mxu0 %v515
        %v537 = vpop.f32.mrf.mxu0
        %v538 = vadd.f32 %v506, %v537
        %539 = vmatmul.f32.gmra.mxu0 %v518
        %v540 = vpop.f32.mrf.mxu0
        %v541 = vadd.f32 %v511, %v540
        %542 = vdwg.mxu0
        %543 = vmatpush.msra.mxu0 0.0
        %544 = vmatpush.msra.mxu0 0.0
        %545 = vmatpush.msra.mxu0 0.0
        %546 = vmatpush.msra.mxu0 0.0
        %547 = vmatpush.msra.mxu0 0.0
        %548 = vmatpush.msra.mxu0 0.0
        %549 = vmatpush.msra.mxu0 0.0
        %550 = vmatpush.msra.mxu0 0.0
        %551 = vmatpush.msra.mxu0 0.0
        %552 = vmatpush.msra.mxu0 0.0
        %553 = vmatpush.msra.mxu0 %v499
        %554 = vmatpush.msra.mxu0 %v496
        %555 = vmatpush.msra.mxu0 %v493
        %556 = vmatpush.msra.mxu0 %v490
        %557 = vmatpush.msra.mxu0 %v487
        %558 = vmatpush.msra.mxu0 %v484
        %559 = vmatmul.f32.gmra.mxu0 %v515
        %v560 = vpop.f32.mrf.mxu0
        %v561 = vadd.f32 %v506, %v560
        %562 = vmatmul.f32.gmra.mxu0 %v518
        %v563 = vpop.f32.mrf.mxu0
        %v564 = vadd.f32 %v511, %v563
        %565 = vdwg.mxu0
        %566 = vmatpush.msra.mxu0 0.0
        %567 = vmatpush.msra.mxu0 0.0
        %568 = vmatpush.msra.mxu0 0.0
        %569 = vmatpush.msra.mxu0 0.0
        %570 = vmatpush.msra.mxu0 0.0
        %571 = vmatpush.msra.mxu0 0.0
        %572 = vmatpush.msra.mxu0 0.0
        %573 = vmatpush.msra.mxu0 0.0
        %574 = vmatpush.msra.mxu0 0.0
        %575 = vmatpush.msra.mxu0 0.0
        %576 = vmatpush.msra.mxu0 %v500
        %577 = vmatpush.msra.mxu0 %v497
        %578 = vmatpush.msra.mxu0 %v494
        %579 = vmatpush.msra.mxu0 %v491
        %580 = vmatpush.msra.mxu0 %v488
        %581 = vmatpush.msra.mxu0 %v485
        %582 = vmatmul.f32.gmra.mxu0 %v515
        %v583 = vpop.f32.mrf.mxu0
        %v584 = vadd.f32 %v506, %v583
        %585 = vmatmul.f32.gmra.mxu0 %v518
        %v586 = vpop.f32.mrf.mxu0
        %v587 = vadd.f32 %v511, %v586
        %588 = vdwg.mxu0
        %589 = vst [vmem:[%s296] sm:$0xff] %v538
        %590 = vst [vmem:[%s296 + $0x8] sm:$0xff] %v561
        %591 = vst [vmem:[%s296 + $0x10] sm:$0xff] %v584
        %592 = vst [vmem:[%s296 + $0x18] sm:$0xff] %v541
        %593 = vst [vmem:[%s296 + $0x20] sm:$0xff] %v564
        %594 = vst [vmem:[%s296 + $0x28] sm:$0xff] %v587
        %v595 = vld [vmem:[%s324] sm:$0x7]
        %v597 = vperm.slane %v595, 0
        %v598 = vperm.slane %v595, 1
        %v599 = vperm.slane %v595, 2
        %v603 = vmul.f32 %v538, %v597
        %v604 = vmul.f32 %v561, %v598
        %v605 = vmul.f32 %v584, %v599
        %v606 = vmul.f32 %v541, %v597
        %v607 = vmul.f32 %v564, %v598
        %v608 = vmul.f32 %v587, %v599
        %v609 = vadd.f32 %v603, %v604
        %v610 = vadd.f32 %v609, %v605
        %611 = vadd.xlane.f32.xlu0 %v610
        %v612 = vpop.xlane.xlu0 %611
        %v613 = vadd.f32 %v606, %v607
        %v614 = vadd.f32 %v613, %v608
        %615 = vadd.xlane.f32.xlu0 %v614
        %v616 = vpop.xlane.xlu0 %615
        %vm617 = vcmask 7168
        %618 = vst.msk [vmem:[%s331] sm:$0xff] %vm617, %v612
        %619 = vst.msk [vmem:[%s331 + $0x8] sm:$0xff] %vm617, %v616
        %v620 = vmul.f32 %v603, %v538
        %v621 = vmul.f32 %v604, %v561
        %v622 = vmul.f32 %v605, %v584
        %v623 = vmul.f32 %v606, %v541
        %v624 = vmul.f32 %v607, %v564
        %v625 = vmul.f32 %v608, %v587
        %v626 = vadd.f32 %v620, %v621
        %v627 = vadd.f32 %v626, %v622
        %628 = vadd.xlane.f32.xlu0 %v627
        %v629 = vpop.xlane.xlu0 %628
        %v630 = vadd.f32 %v623, %v624
        %v631 = vadd.f32 %v630, %v625
        %632 = vadd.xlane.f32.xlu0 %v631
        %v633 = vpop.xlane.xlu0 %632
        %634 = vst.msk [vmem:[%s336] sm:$0xff] %vm617, %v629
        %635 = vst.msk [vmem:[%s336 + $0x8] sm:$0xff] %vm617, %v633
        %s636 = sand.u32 %s147, 1
        %s637 = sand.u32 %s147, 1
        %s638 = smul.addr %s637, 48
        %s639 = scalar_lea.vmem [#allocation4], %s638
        %p640 = scmp.lt.s32.totalorder %s19, 1
        %s641 = scalar_select %p640, %s19, 1
        %s642 = smul.addr %s641, 2
        %s643 = smul.addr %s642, 8
        %s644 = scalar_lea.vmem %s6, %s643
        %p645 = scmp.lt.s32.totalorder %s19, 1
        %s646 = scalar_select %p645, %s19, 1
        %s647 = smul.addr %s646, 2
        %s648 = smul.addr %s647, 8
        %s649 = scalar_lea.vmem %s7, %s648
        // Predicated region
        $region41: #{decoder_forward.2} parent=39 // pred_check
          %p650 = pneg %p157
        $region42: #{decoder_forward.2} parent=39 // pred_check_branch
          %652 = sbr.rel (%p650) target = $region44
        $region43: #{decoder_forward.2} parent=39 // pred_region
          %s653 = smul.u32 3, %s19
          %s654 = smul.addr %s653, 8
          %s655 = scalar_lea.vmem %s5, %s654
          // Predicated region
          $region45: #{decoder_forward.2} parent=43 // pred_check
            _
          $region46: #{decoder_forward.2} parent=43 // pred_check_branch
            %657 = sbr.rel (0) target = $region48
          $region47: #{decoder_forward.2} parent=43 // pred_region
            // Predicated region
            $region49: #{decoder_forward.2} parent=47 // pred_check
              _
            $region50: #{decoder_forward.2} parent=47 // pred_check_branch
              %659 = sbr.rel (0) target = $region52
            $region51: #{decoder_forward.2} parent=47 // pred_region
              loop: start=0, step=1, limit=1
              $region53: #{decoder_forward.2} parent=51 // loop_pre_header
                _
              $region54: #{decoder_forward.2} parent=51 // loop_header
                %s661 = sphi 0, %s665
                %p662 = scmp.ge.s32.totalorder %s661, 1
                %s666 = sphi %s639, %s639
                %s667 = sphi %s655, %s655
              $region55: #{decoder_forward.2} parent=51 // loop_header_branch
                %664 = sbr.rel (%p662) target = $region59
              $region56: #{decoder_forward.2} parent=51 // loop_body
                %v668 = vld [vmem:[%s666] sm:$0xff]
                %669 = vst [vmem:[%s667] sm:$0xff] %v668
                %v670 = vld [vmem:[%s666 + $0x8] sm:$0xff]
                %671 = vst [vmem:[%s667 + $0x8] sm:$0xff] %v670
                %v672 = vld [vmem:[%s666 + $0x10] sm:$0xff]
                %673 = vst [vmem:[%s667 + $0x10] sm:$0xff] %v672
                %v674 = vld [vmem:[%s666 + $0x18] sm:$0xff]
                %675 = vst [vmem:[%s667 + $0x30] sm:$0xff] %v674
                %v676 = vld [vmem:[%s666 + $0x20] sm:$0xff]
                %677 = vst [vmem:[%s667 + $0x38] sm:$0xff] %v676
                %v678 = vld [vmem:[%s666 + $0x28] sm:$0xff]
                %679 = vst [vmem:[%s667 + $0x40] sm:$0xff] %v678
              $region57: #{decoder_forward.2} parent=51 // loop_footer
                %s665 = sadd.s32 1, %s661
              $region58: #{decoder_forward.2} parent=51 // loop_footer_branch
                %660 = sbr.rel target = $region54
              $region59: #{decoder_forward.2} parent=51 // loop_exit
                _
            $region52: #{decoder_forward.2} parent=47 // pred_fallthru
              _
            // Predicated region
            $region60: #{decoder_forward.2} parent=47 // pred_check
              _
            $region61: #{decoder_forward.2} parent=47 // pred_check_branch
              %681 = sbr.rel target = $region63
            $region62: #{decoder_forward.2} parent=47 // pred_region
              _
            $region63: #{decoder_forward.2} parent=47 // pred_fallthru
              _
          $region48: #{decoder_forward.2} parent=43 // pred_fallthru
            _
          %682 = vnop
        $region44: #{decoder_forward.2} parent=39 // pred_fallthru
          _
        // Predicated region
        $region64: #{decoder_forward.2} parent=39 // pred_check
          %p683 = pneg %p183
        $region65: #{decoder_forward.2} parent=39 // pred_check_branch
          %685 = sbr.rel (%p683) target = $region67
        $region66: #{decoder_forward.2} parent=39 // pred_region
          _
        $region67: #{decoder_forward.2} parent=39 // pred_fallthru
          _
        // Predicated region
        $region68: #{decoder_forward.2} parent=39 // pred_check
          %p686 = pneg %p209
        $region69: #{decoder_forward.2} parent=39 // pred_check_branch
          %688 = sbr.rel (%p686) target = $region71
        $region70: #{decoder_forward.2} parent=39 // pred_region
          _
        $region71: #{decoder_forward.2} parent=39 // pred_fallthru
          _
      $region40: #{decoder_forward.2} parent=5 // pred_fallthru
        _
      %p689 = scmp.le.s32.totalorder 2, %s14
      // Predicated region
      $region72: #{decoder_forward.2} parent=5 // pred_check
        %p690 = pneg %p689
      $region73: #{decoder_forward.2} parent=5 // pred_check_branch
        %692 = sbr.rel (%p690) target = $region75
      $region74: #{decoder_forward.2} parent=5 // pred_region
        %s693 = ssub.s32 %s14, 2
        // Predicated region
        $region76: #{decoder_forward.2} parent=74 // pred_check
          %p694 = pneg %p163
        $region77: #{decoder_forward.2} parent=74 // pred_check_branch
          %696 = sbr.rel (%p694) target = $region79
        $region78: #{decoder_forward.2} parent=74 // pred_region
          %s697 = sand.u32 %s148, 1
          %s698 = sand.u32 %s148, 1
          %s699 = smul.addr %s698, 48
          %s700 = scalar_lea.vmem [#allocation4], %s699
        $region79: #{decoder_forward.2} parent=74 // pred_fallthru
          _
        // Predicated region
        $region80: #{decoder_forward.2} parent=74 // pred_check
          %p701 = pneg %p189
        $region81: #{decoder_forward.2} parent=74 // pred_check_branch
          %703 = sbr.rel (%p701) target = $region83
        $region82: #{decoder_forward.2} parent=74 // pred_region
          %p704 = scmp.lt.s32.totalorder %s20, 1
          %s705 = scalar_select %p704, %s20, 1
          %s706 = smul.addr %s705, 2
          %s707 = smul.addr %s706, 8
          %s708 = scalar_lea.vmem %s6, %s707
        $region83: #{decoder_forward.2} parent=74 // pred_fallthru
          _
        // Predicated region
        $region84: #{decoder_forward.2} parent=74 // pred_check
          %p709 = pneg %p215
        $region85: #{decoder_forward.2} parent=74 // pred_check_branch
          %711 = sbr.rel (%p709) target = $region87
        $region86: #{decoder_forward.2} parent=74 // pred_region
          %p712 = scmp.lt.s32.totalorder %s20, 1
          %s713 = scalar_select %p712, %s20, 1
          %s714 = smul.addr %s713, 2
          %s715 = smul.addr %s714, 8
          %s716 = scalar_lea.vmem %s7, %s715
        $region87: #{decoder_forward.2} parent=74 // pred_fallthru
          _
      $region75: #{decoder_forward.2} parent=5 // pred_fallthru
        _
    $region6: #{decoder_forward.2} parent=1 // loop_footer
      %s18 = sadd.s32 1, %s14
    $region7: #{decoder_forward.2} parent=1 // loop_footer_branch
      %13 = sbr.rel target = $region3
    $region8: #{decoder_forward.2} parent=1 // loop_exit
      _

</llo_original>
